<compile_context>
chip_gen: v7x
topology: tpu7x:2x2x1
jax: 0.10.0
libtpu: 0.0.40
codegen_flags: <defaults>
</compile_context>

<pallas_src>
import numpy as np

import jax
import jax.numpy as jnp
from jax.experimental import pallas as pl
from jax.experimental.pallas import tpu as pltpu


def _round_up(x: int, m: int) -> int:
    return ((x + m - 1) // m) * m


def _interp_matrix(out_size: int, in_size: int) -> np.ndarray:
    """Row-stochastic (out_size, in_size) matrix for 1-D linear interpolation
    with align_corners=True semantics (PyTorch trilinear/bilinear)."""
    A = np.zeros((out_size, in_size), dtype=np.float32)
    if out_size == 1 or in_size == 1:
        A[:, 0] = 1.0
        return A
    scale = (in_size - 1) / (out_size - 1)
    for i in range(out_size):
        src = i * scale
        i0 = min(int(np.floor(src)), in_size - 1)
        i1 = min(i0 + 1, in_size - 1)
        w1 = src - i0
        A[i, i0] += 1.0 - w1
        A[i, i1] += w1
    return A


def _vmem_capacity_bytes() -> int:
    """Physical VMEM of the attached TPU; conservative fallback (v7x floor)."""
    try:
        fn = getattr(pltpu, "get_tpu_info", None)
        if fn is not None:
            cap = int(getattr(fn(), "vmem_capacity_bytes", 0) or 0)
            if cap > 0:
                return cap
    except Exception:
        pass
    return 64 << 20


# ---------------------------------------------------------------------------
# Primary path: one Kronecker matmul per batched block of flattened planes.
# ---------------------------------------------------------------------------
def _kron_kernel_split(k_hi_ref, k_lo_ref, x_ref, o_ref):
    # f32 activations + bf16 hi/lo weight split: three bf16 MXU matmuls with
    # f32 accumulation (~1e-5 rel error) instead of one multi-pass f32 matmul.
    xf = x_ref[...].astype(jnp.float32)
    x_hi = xf.astype(jnp.bfloat16)
    x_lo = (xf - x_hi.astype(jnp.float32)).astype(jnp.bfloat16)
    k_hi = k_hi_ref[...]
    k_lo = k_lo_ref[...]
    y = jnp.dot(x_hi, k_hi, preferred_element_type=jnp.float32)
    y = y + jnp.dot(x_hi, k_lo, preferred_element_type=jnp.float32)
    y = y + jnp.dot(x_lo, k_hi, preferred_element_type=jnp.float32)
    o_ref[...] = y.astype(o_ref.dtype)


def _kron_kernel_plain(k_ref, x_ref, o_ref):
    # Low-precision (bf16/f16) activations go straight to the MXU.
    y = jnp.dot(x_ref[...], k_ref[...], preferred_element_type=jnp.float32)
    o_ref[...] = y.astype(o_ref.dtype)


def _call_kron(x_flat, consts, kernel, tb, grid_b, vmem_limit):
    b, k_in = x_flat.shape
    k_out = consts[0].shape[1]
    # The constant operands keep the same block index every step, so the
    # pipeline only DMAs them once; their (double-buffered) VMEM footprint is
    # already charged in the tb sizing.
    const_specs = [pl.BlockSpec(c.shape, lambda i: (0, 0)) for c in consts]
    return pl.pallas_call(
        kernel,
        out_shape=jax.ShapeDtypeStruct((b, k_out), x_flat.dtype),
        grid_spec=pl.GridSpec(
            grid=(grid_b,),
            in_specs=const_specs + [pl.BlockSpec((tb, k_in), lambda i: (i, 0))],
            out_specs=pl.BlockSpec((tb, k_out), lambda i: (i, 0)),
        ),
        compiler_params=pltpu.CompilerParams(
            dimension_semantics=("parallel",),
            vmem_limit_bytes=int(vmem_limit)),
    )(*consts, x_flat)


# ---------------------------------------------------------------------------
# Fallback path (planes too large for a resident Kron matrix): batched
# separable interpolation.
# ---------------------------------------------------------------------------
def _sep_kernel(ah_ref, awt_ref, x_ref, o_ref):
    # ah_ref:  (H_out, H)   awt_ref: (W, W_out)  (A_w pre-transposed on host)
    # x_ref:   (TB, H, W)   o_ref:   (TB, H_out, W_out)
    tb, h, w = x_ref.shape
    h_out = ah_ref.shape[0]
    w_out = awt_ref.shape[1]
    x = x_ref[...].astype(jnp.float32)
    # W interpolation as ONE 2-D matmul: (TB*H, W) @ (W, W_out).
    t = jnp.dot(x.reshape(tb * h, w), awt_ref[...],
                preferred_element_type=jnp.float32).reshape(tb, h, w_out)
    # H interpolation: per-plane contraction over H (batched matmul).
    # TODO(synk): fold into a single 2-D matmul (needs an in-kernel layout
    # change); batched form kept simple on this rarely-used path.
    ah_b = jnp.broadcast_to(ah_ref[...], (tb, h_out, h))
    y = jax.lax.dot_general(ah_b, t, (((2,), (1,)), ((0,), (0,))),
                            preferred_element_type=jnp.float32)
    o_ref[...] = y.astype(o_ref.dtype)


def _call_sep(x3, ah, awt, tb, grid_b, vmem_limit):
    b, h, w = x3.shape
    h_out, w_out = ah.shape[0], awt.shape[1]
    return pl.pallas_call(
        _sep_kernel,
        out_shape=jax.ShapeDtypeStruct((b, h_out, w_out), x3.dtype),
        grid_spec=pl.GridSpec(
            grid=(grid_b,),
            in_specs=[
                pl.BlockSpec((h_out, h), lambda i: (0, 0)),
                pl.BlockSpec((w, w_out), lambda i: (0, 0)),
                pl.BlockSpec((tb, h, w), lambda i: (i, 0, 0)),
            ],
            out_specs=pl.BlockSpec((tb, h_out, w_out), lambda i: (i, 0, 0)),
        ),
        compiler_params=pltpu.CompilerParams(
            dimension_semantics=("parallel",),
            vmem_limit_bytes=int(vmem_limit)),
    )(ah, awt, x3)


# ---------------------------------------------------------------------------
# Wrapper
# ---------------------------------------------------------------------------
_TB_MAX = 2048                     # max batched plane-rows per grid step
_KRON_CONST_MAX = 4 << 20          # max bytes (single copy) of resident K^T


def up_2(x: jax.Array) -> jax.Array:
    """Up_2.forward: trilinear upsample, scale (1, 2, 2), align_corners=True,
    on an NCDHW tensor (depth axis is an exact identity)."""
    n, c, d, h, w = x.shape
    h_out, w_out = 2 * h, 2 * w
    b = n * c * d
    itemsize = jnp.dtype(x.dtype).itemsize
    low_precision = itemsize < 4

    a_h = _interp_matrix(h_out, h)
    a_w = _interp_matrix(w_out, w)
    k_in, k_out = h * w, h_out * w_out

    # --- VMEM policy (per chip generation) ---------------------------------
    cap = _vmem_capacity_bytes()                       # 128 MiB v5e/v6e, 64 MiB v7x
    vmem_limit = max(32 << 20, min(cap * 3 // 4, 96 << 20))
    budget = vmem_limit // 2                           # headroom for compiler scratch

    # Sublane alignment of the batched-planes axis (16 for bf16/f16 packing).
    align = max(8, 32 // itemsize)

    kron_const_bytes = k_in * k_out * (2 if low_precision else 4)  # bf16 / bf16 hi+lo
    use_kron = kron_const_bytes <= min(_KRON_CONST_MAX, budget // 4)

    if use_kron:
        # Streamed in/out double-buffered, +50% slack for in-kernel temporaries.
        per_row = 3 * (k_in + k_out) * itemsize
        if not low_precision:
            per_row += 4 * k_in                        # bf16 hi/lo activation temps
        tb_cap = max(align, (budget - 2 * kron_const_bytes) // per_row)
    else:
        per_row = (3 * (h * w + h_out * w_out) * itemsize
                   + 4 * h * w_out + 4 * h_out * h)
        tb_cap = max(align, budget // per_row)

    # Pick tb to (nearly) divide b: no host-side pad / slice round trips —
    # Pallas masks the (< align rows) overhang of the final partial block.
    # Small b => single grid step (no forced split on 1-TC chips); large b
    # naturally gives several "parallel" steps for v7x's two TensorCores.
    tb_limit = int(min(_TB_MAX, tb_cap, _round_up(b, align)))
    grid_b = pl.cdiv(b, tb_limit)
    tb = _round_up(pl.cdiv(b, grid_b), align)
    grid_b = pl.cdiv(b, tb)

    if use_kron:
        # K^T[h*W + w, ho*W_out + wo] = A_h[ho, h] * A_w[wo, w]
        kt = np.kron(a_h, a_w).T                       # (k_in, k_out), f32
        x_flat = x.reshape(b, k_in)
        if low_precision:
            consts = [jnp.asarray(kt).astype(x.dtype)]
            kernel = _kron_kernel_plain
        else:
            kt_f32 = jnp.asarray(kt, dtype=jnp.float32)
            kt_hi = kt_f32.astype(jnp.bfloat16)
            kt_lo = (kt_f32 - kt_hi.astype(jnp.float32)).astype(jnp.bfloat16)
            consts = [kt_hi, kt_lo]
            kernel = _kron_kernel_split
        out_flat = _call_kron(x_flat, consts, kernel, tb, grid_b, vmem_limit)
        return out_flat.reshape(n, c, d, h_out, w_out)
    else:
        ah = jnp.asarray(a_h)                          # (H_out, H)
        awt = jnp.asarray(a_w.T)                       # (W, W_out) pre-transposed
        x3 = x.reshape(b, h, w)
        out3 = _call_sep(x3, ah, awt, tb, grid_b, vmem_limit)
        return out3.reshape(n, c, d, h_out, w_out)


if __name__ == "__main__":
    key = jax.random.PRNGKey(0)
    # Small NCDHW input consistent with a 3D U-Net feature map.
    N, C, D, H, W = 2, 4, 4, 16, 16
    x = jax.random.normal(key, (N, C, D, H, W), dtype=jnp.float32)

    y = up_2(x)
    jax.block_until_ready(y)

    assert y.shape == (N, C, D, 2 * H, 2 * W), y.shape

    # Reference: explicit separable align_corners=True interpolation in
    # float64 numpy (avoids any TPU matmul-precision ambiguity).
    a_h_ref = _interp_matrix(2 * H, H).astype(np.float64)
    a_w_ref = _interp_matrix(2 * W, W).astype(np.float64)
    y_ref = np.einsum('oh,ncdhw,pw->ncdop',
                      a_h_ref, np.asarray(x, dtype=np.float64), a_w_ref)
    np.testing.assert_allclose(np.asarray(y, dtype=np.float64), y_ref,
                               atol=1e-4, rtol=1e-4)

    # align_corners=True: corner output pixels equal corner input pixels.
    x_np = np.asarray(x)
    y_np = np.asarray(y)
    np.testing.assert_allclose(y_np[..., 0, 0], x_np[..., 0, 0], atol=1e-4)
    np.testing.assert_allclose(y_np[..., -1, -1], x_np[..., -1, -1], atol=1e-4)

    print("KERNEL_OK")
</pallas_src>

<mosaic_0001>
module attributes {stable_mosaic.version = 11 : i64} {
  func.func @_kron_kernel_split(%arg0: i32, %arg1: memref<256x1024xbf16, #tpu.memory_space<vmem>>, %arg2: memref<256x1024xbf16, #tpu.memory_space<vmem>>, %arg3: memref<32x256xf32, #tpu.memory_space<vmem>>, %arg4: memref<32x1024xf32, #tpu.memory_space<vmem>>) attributes {dimension_semantics = [#tpu.dimension_semantics<parallel>], iteration_bounds = array<i64: 1>, scalar_prefetch = 0 : i64, scratch_operands = 0 : i64, tpu.core_type = #tpu.core_type<tc>, window_params = [{pipeline_mode = #tpu.pipeline_mode<synchronous>, transform_indices = @transform_0, window_bounds = array<i64: 256, 1024>}, {pipeline_mode = #tpu.pipeline_mode<synchronous>, transform_indices = @transform_1, window_bounds = array<i64: 256, 1024>}, {transform_indices = @transform_2, window_bounds = array<i64: 32, 256>}, {transform_indices = @transform_3, window_bounds = array<i64: 32, 1024>}]} {
    %c0 = arith.constant 0 : index
    %c0_0 = arith.constant 0 : index
    %0 = vector.load %arg3[%c0, %c0_0] : memref<32x256xf32, #tpu.memory_space<vmem>>, vector<32x256xf32>
    %1 = arith.truncf %0 : vector<32x256xf32> to vector<32x256xbf16>
    %2 = arith.extf %1 : vector<32x256xbf16> to vector<32x256xf32>
    %3 = arith.subf %0, %2 : vector<32x256xf32>
    %4 = arith.truncf %3 : vector<32x256xf32> to vector<32x256xbf16>
    %c0_1 = arith.constant 0 : index
    %c0_2 = arith.constant 0 : index
    %5 = vector.load %arg1[%c0_1, %c0_2] : memref<256x1024xbf16, #tpu.memory_space<vmem>>, vector<256x1024xbf16>
    %c0_3 = arith.constant 0 : index
    %c0_4 = arith.constant 0 : index
    %6 = vector.load %arg2[%c0_3, %c0_4] : memref<256x1024xbf16, #tpu.memory_space<vmem>>, vector<256x1024xbf16>
    %cst = arith.constant dense<0.000000e+00> : vector<32x1024xf32>
    %7 = tpu.matmul %1, %5, %cst {dimension_numbers = #tpu.dot_dimension_numbers<[1], [0], [0], [1], [0, 0, 1, 1], [], []>} : vector<32x256xbf16>, vector<256x1024xbf16>, vector<32x1024xf32> -> vector<32x1024xf32>
    %cst_5 = arith.constant dense<0.000000e+00> : vector<32x1024xf32>
    %8 = tpu.matmul %1, %6, %cst_5 {dimension_numbers = #tpu.dot_dimension_numbers<[1], [0], [0], [1], [0, 0, 1, 1], [], []>} : vector<32x256xbf16>, vector<256x1024xbf16>, vector<32x1024xf32> -> vector<32x1024xf32>
    %9 = arith.addf %7, %8 : vector<32x1024xf32>
    %cst_6 = arith.constant dense<0.000000e+00> : vector<32x1024xf32>
    %10 = tpu.matmul %4, %5, %cst_6 {dimension_numbers = #tpu.dot_dimension_numbers<[1], [0], [0], [1], [0, 0, 1, 1], [], []>} : vector<32x256xbf16>, vector<256x1024xbf16>, vector<32x1024xf32> -> vector<32x1024xf32>
    %11 = arith.addf %9, %10 : vector<32x1024xf32>
    %c0_7 = arith.constant 0 : index
    %c0_8 = arith.constant 0 : index
    %12 = vector.load %arg4[%c0_7, %c0_8] : memref<32x1024xf32, #tpu.memory_space<vmem>>, vector<32x1024xf32>
    tpu.vector_store %arg4[%c0_7, %c0_8], %11 {strides = array<i32>} : memref<32x1024xf32, #tpu.memory_space<vmem>>, vector<32x1024xf32>,
    return
  }
  func.func @transform_0(%arg0: i32) -> (i32, i32) {
    %c0_i32 = arith.constant 0 : i32
    %c0_i32_0 = arith.constant 0 : i32
    %c0_i32_1 = arith.constant 0 : i32
    return %c0_i32, %c0_i32_0 : i32, i32
  }
  func.func @transform_1(%arg0: i32) -> (i32, i32) {
    %c0_i32 = arith.constant 0 : i32
    %c0_i32_0 = arith.constant 0 : i32
    %c0_i32_1 = arith.constant 0 : i32
    return %c0_i32, %c0_i32_0 : i32, i32
  }
  func.func @transform_2(%arg0: i32) -> (i32, i32) {
    %c0_i32 = arith.constant 0 : i32
    %c0_i32_0 = arith.constant 0 : i32
    return %arg0, %c0_i32 : i32, i32
  }
  func.func @transform_3(%arg0: i32) -> (i32, i32) {
    %c0_i32 = arith.constant 0 : i32
    %c0_i32_0 = arith.constant 0 : i32
    return %arg0, %c0_i32 : i32, i32
  }
}

</mosaic_0001>

<llo_original>
// kernel: tpu_custom_call.1
$region0: #{tpu_custom_call.1}
  #allocation0 [shape = 'u32[]', space=smem, size = 0x4, offset = 0x4, fixed_abs, tag = 'smem constant byte address 0x4 - core index']
  #allocation1 [shape = 'u32[144,128]{1,0:T(1,128)}', space=vmem, size = 0x12000, scoped, tag = 'internal scratch']
  %s0 = inlined_call_operand.hbm [shape: bf16[256,1024], index: 0, kind: input, shape index: {}]
  %s1 = inlined_call_operand.hbm [shape: bf16[256,1024], index: 1, kind: input, shape index: {}]
  %s2 = inlined_call_operand.hbm [shape: f32[32,256], index: 2, kind: input, shape index: {}]
  %s3 = inlined_call_operand.hbm [shape: f32[32,1024], index: 3, kind: output, shape index: {}]
  %s4 = sld [smem:[#allocation0]]
  $region34: #{tpu_custom_call.1} parent=0
    _
  %s6 = ssub.s32 1, %s4
  %s7 = scalar_select 0, %s6, %s4
  $region1: #{tpu_custom_call.1} parent=0
    #allocation2 [shape = 'u8[524288]{0}', space=vmem, size = 0x80000, scoped, tag = 'input window, operand 0, single buffered']
    #allocation3 [shape = 's32[1]{0}', space=sflag, size = 0x4, scoped, tag = 'scoped memory for tpu_custom_call.1']
    #allocation4 [shape = 's32[1]{0}', space=sflag, size = 0x4, scoped, tag = 'scoped memory for tpu_custom_call.1']
    #allocation5 [shape = 'u8[524288]{0}', space=vmem, size = 0x80000, scoped, tag = 'input window, operand 1, single buffered']
    #allocation6 [shape = 's32[1]{0}', space=sflag, size = 0x4, scoped, tag = 'scoped memory for tpu_custom_call.1']
    #allocation7 [shape = 'u8[32768]{0}', space=vmem, size = 0x8000, scoped, tag = 'input window, operand 2, single buffered']
    #allocation8 [shape = 'u8[131072]{0}', space=vmem, size = 0x20000, scoped, tag = 'output window, operand 0, single buffered']
    %8 = vsyncpa [#allocation3], 0
    %9 = vsyncpa [#allocation6], 0
    %10 = vsyncpa [#allocation4], 0
    // Predicated region
    $region2: #{tpu_custom_call.1} parent=1 // pred_check
      _
    $region3: #{tpu_custom_call.1} parent=1 // pred_check_branch
      %12 = sbr.rel (0) target = $region5
    $region4: #{tpu_custom_call.1} parent=1 // pred_region
      %s14 = ssub.s32 16384, 16384
      %15 = vsyncadd [#allocation3], %s14
      %s16 = sshll.u32 [#allocation2], 4
      %s17 = int_to_ptr.vmem [resolvable:$true] %s16
      %22 = dma.hbm_to_vmem [thread:$0]  %s0, 16384, %s17, [#allocation3], 512, 512, 32
    $region5: #{tpu_custom_call.1} parent=1 // pred_fallthru
      _
    // Predicated region
    $region6: #{tpu_custom_call.1} parent=1 // pred_check
      _
    $region7: #{tpu_custom_call.1} parent=1 // pred_check_branch
      %24 = sbr.rel (0) target = $region9
    $region8: #{tpu_custom_call.1} parent=1 // pred_region
      %s26 = ssub.s32 16384, 16384
      %27 = vsyncadd [#allocation6], %s26
      %s28 = sshll.u32 [#allocation5], 4
      %s29 = int_to_ptr.vmem [resolvable:$true] %s28
      %34 = dma.hbm_to_vmem [thread:$0]  %s1, 16384, %s29, [#allocation6], 512, 512, 32
    $region9: #{tpu_custom_call.1} parent=1 // pred_fallthru
      _
    // Predicated region
    $region10: #{tpu_custom_call.1} parent=1 // pred_check
      _
    $region11: #{tpu_custom_call.1} parent=1 // pred_check_branch
      %36 = sbr.rel (0) target = $region13
    $region12: #{tpu_custom_call.1} parent=1 // pred_region
      %s38 = ssub.s32 1024, 1024
      %39 = vsyncadd [#allocation6], %s38
      %s40 = sshll.u32 [#allocation7], 4
      %s41 = int_to_ptr.vmem [resolvable:$true] %s40
      %46 = dma.hbm_to_vmem [thread:$0]  %s2, 1024, %s41, [#allocation6], 256, 256, 16
    $region13: #{tpu_custom_call.1} parent=1 // pred_fallthru
      _
    // Predicated region
    $region14: #{tpu_custom_call.1} parent=1 // pred_check
      _
    $region15: #{tpu_custom_call.1} parent=1 // pred_check_branch
      %48 = sbr.rel (0) target = $region17
    $region16: #{tpu_custom_call.1} parent=1 // pred_region
      %49 = dma.done [#allocation3], 16384
    $region17: #{tpu_custom_call.1} parent=1 // pred_fallthru
      _
    // Predicated region
    $region18: #{tpu_custom_call.1} parent=1 // pred_check
      _
    $region19: #{tpu_custom_call.1} parent=1 // pred_check_branch
      %51 = sbr.rel (0) target = $region21
    $region20: #{tpu_custom_call.1} parent=1 // pred_region
      %52 = dma.done [#allocation6], 16384
    $region21: #{tpu_custom_call.1} parent=1 // pred_fallthru
      _
    // Predicated region
    $region22: #{tpu_custom_call.1} parent=1 // pred_check
      _
    $region23: #{tpu_custom_call.1} parent=1 // pred_check_branch
      %54 = sbr.rel (0) target = $region25
    $region24: #{tpu_custom_call.1} parent=1 // pred_region
      %55 = dma.done [#allocation6], 1024
    $region25: #{tpu_custom_call.1} parent=1 // pred_fallthru
      _
    %v56 = vld [vmem:[#allocation7] sm:$0xff]
    %v57 = vld [vmem:[#allocation7 + $0x8] sm:$0xff]
    %v58 = vld [vmem:[#allocation7 + $0x10] sm:$0xff]
    %v59 = vld [vmem:[#allocation7 + $0x18] sm:$0xff]
    %v60 = vld [vmem:[#allocation7 + $0x20] sm:$0xff]
    %v61 = vld [vmem:[#allocation7 + $0x28] sm:$0xff]
    %v62 = vld [vmem:[#allocation7 + $0x30] sm:$0xff]
    %v63 = vld [vmem:[#allocation7 + $0x38] sm:$0xff]
    %v64 = vpack.c.bf16 %v58, %v56
    %v65 = vpack.c.bf16 %v59, %v57
    %v66 = vpack.c.bf16 %v62, %v60
    %v67 = vpack.c.bf16 %v63, %v61
    %v68 = vunpack.c.l.bf16 %v64
    %v69 = vunpack.c.l.bf16 %v65
    %v70 = vunpack.c.h.bf16 %v64
    %v71 = vunpack.c.h.bf16 %v65
    %v72 = vunpack.c.l.bf16 %v66
    %v73 = vunpack.c.l.bf16 %v67
    %v74 = vunpack.c.h.bf16 %v66
    %v75 = vunpack.c.h.bf16 %v67
    %v76 = vsub.f32 %v56, %v68
    %v77 = vsub.f32 %v57, %v69
    %v78 = vsub.f32 %v58, %v70
    %v79 = vsub.f32 %v59, %v71
    %v80 = vsub.f32 %v60, %v72
    %v81 = vsub.f32 %v61, %v73
    %v82 = vsub.f32 %v62, %v74
    %v83 = vsub.f32 %v63, %v75
    %v84 = vpack.c.bf16 %v78, %v76
    %v85 = vpack.c.bf16 %v79, %v77
    %v86 = vpack.c.bf16 %v82, %v80
    %v87 = vpack.c.bf16 %v83, %v81
    %v88 = vld [vmem:[#allocation2] sm:$0xff]
    %v89 = vld [vmem:[#allocation2 + $0x8] sm:$0xff]
    %v90 = vld [vmem:[#allocation2 + $0x10] sm:$0xff]
    %v91 = vld [vmem:[#allocation2 + $0x18] sm:$0xff]
    %v92 = vld [vmem:[#allocation2 + $0x20] sm:$0xff]
    %v93 = vld [vmem:[#allocation2 + $0x28] sm:$0xff]
    %v94 = vld [vmem:[#allocation2 + $0x30] sm:$0xff]
    %v95 = vld [vmem:[#allocation2 + $0x38] sm:$0xff]
    %v96 = vld [vmem:[#allocation2 + $0x40] sm:$0xff]
    %v97 = vld [vmem:[#allocation2 + $0x48] sm:$0xff]
    %v98 = vld [vmem:[#allocation2 + $0x50] sm:$0xff]
    %v99 = vld [vmem:[#allocation2 + $0x58] sm:$0xff]
    %v100 = vld [vmem:[#allocation2 + $0x60] sm:$0xff]
    %v101 = vld [vmem:[#allocation2 + $0x68] sm:$0xff]
    %v102 = vld [vmem:[#allocation2 + $0x70] sm:$0xff]
    %v103 = vld [vmem:[#allocation2 + $0x78] sm:$0xff]
    %v104 = vld [vmem:[#allocation2 + $0x80] sm:$0xff]
    %v105 = vld [vmem:[#allocation2 + $0x88] sm:$0xff]
    %v106 = vld [vmem:[#allocation2 + $0x90] sm:$0xff]
    %v107 = vld [vmem:[#allocation2 + $0x98] sm:$0xff]
    %v108 = vld [vmem:[#allocation2 + $0xa0] sm:$0xff]
    %v109 = vld [vmem:[#allocation2 + $0xa8] sm:$0xff]
    %v110 = vld [vmem:[#allocation2 + $0xb0] sm:$0xff]
    %v111 = vld [vmem:[#allocation2 + $0xb8] sm:$0xff]
    %v112 = vld [vmem:[#allocation2 + $0xc0] sm:$0xff]
    %v113 = vld [vmem:[#allocation2 + $0xc8] sm:$0xff]
    %v114 = vld [vmem:[#allocation2 + $0xd0] sm:$0xff]
    %v115 = vld [vmem:[#allocation2 + $0xd8] sm:$0xff]
    %v116 = vld [vmem:[#allocation2 + $0xe0] sm:$0xff]
    %v117 = vld [vmem:[#allocation2 + $0xe8] sm:$0xff]
    %v118 = vld [vmem:[#allocation2 + $0xf0] sm:$0xff]
    %v119 = vld [vmem:[#allocation2 + $0xf8] sm:$0xff]
    %v120 = vld [vmem:[#allocation2 + $0x100] sm:$0xff]
    %v121 = vld [vmem:[#allocation2 + $0x108] sm:$0xff]
    %v122 = vld [vmem:[#allocation2 + $0x110] sm:$0xff]
    %v123 = vld [vmem:[#allocation2 + $0x118] sm:$0xff]
    %v124 = vld [vmem:[#allocation2 + $0x120] sm:$0xff]
    %v125 = vld [vmem:[#allocation2 + $0x128] sm:$0xff]
    %v126 = vld [vmem:[#allocation2 + $0x130] sm:$0xff]
    %v127 = vld [vmem:[#allocation2 + $0x138] sm:$0xff]
    %v128 = vld [vmem:[#allocation2 + $0x140] sm:$0xff]
    %v129 = vld [vmem:[#allocation2 + $0x148] sm:$0xff]
    %v130 = vld [vmem:[#allocation2 + $0x150] sm:$0xff]
    %v131 = vld [vmem:[#allocation2 + $0x158] sm:$0xff]
    %v132 = vld [vmem:[#allocation2 + $0x160] sm:$0xff]
    %v133 = vld [vmem:[#allocation2 + $0x168] sm:$0xff]
    %v134 = vld [vmem:[#allocation2 + $0x170] sm:$0xff]
    %v135 = vld [vmem:[#allocation2 + $0x178] sm:$0xff]
    %v136 = vld [vmem:[#allocation2 + $0x180] sm:$0xff]
    %v137 = vld [vmem:[#allocation2 + $0x188] sm:$0xff]
    %v138 = vld [vmem:[#allocation2 + $0x190] sm:$0xff]
    %v139 = vld [vmem:[#allocation2 + $0x198] sm:$0xff]
    %v140 = vld [vmem:[#allocation2 + $0x1a0] sm:$0xff]
    %v141 = vld [vmem:[#allocation2 + $0x1a8] sm:$0xff]
    %v142 = vld [vmem:[#allocation2 + $0x1b0] sm:$0xff]
    %v143 = vld [vmem:[#allocation2 + $0x1b8] sm:$0xff]
    %v144 = vld [vmem:[#allocation2 + $0x1c0] sm:$0xff]
    %v145 = vld [vmem:[#allocation2 + $0x1c8] sm:$0xff]
    %v146 = vld [vmem:[#allocation2 + $0x1d0] sm:$0xff]
    %v147 = vld [vmem:[#allocation2 + $0x1d8] sm:$0xff]
    %v148 = vld [vmem:[#allocation2 + $0x1e0] sm:$0xff]
    %v149 = vld [vmem:[#allocation2 + $0x1e8] sm:$0xff]
    %v150 = vld [vmem:[#allocation2 + $0x1f0] sm:$0xff]
    %v151 = vld [vmem:[#allocation2 + $0x1f8] sm:$0xff]
    %v152 = vld [vmem:[#allocation2 + $0x200] sm:$0xff]
    %v153 = vld [vmem:[#allocation2 + $0x208] sm:$0xff]
    %v154 = vld [vmem:[#allocation2 + $0x210] sm:$0xff]
    %v155 = vld [vmem:[#allocation2 + $0x218] sm:$0xff]
    %v156 = vld [vmem:[#allocation2 + $0x220] sm:$0xff]
    %v157 = vld [vmem:[#allocation2 + $0x228] sm:$0xff]
    %v158 = vld [vmem:[#allocation2 + $0x230] sm:$0xff]
    %v159 = vld [vmem:[#allocation2 + $0x238] sm:$0xff]
    %v160 = vld [vmem:[#allocation2 + $0x240] sm:$0xff]
    %v161 = vld [vmem:[#allocation2 + $0x248] sm:$0xff]
    %v162 = vld [vmem:[#allocation2 + $0x250] sm:$0xff]
    %v163 = vld [vmem:[#allocation2 + $0x258] sm:$0xff]
    %v164 = vld [vmem:[#allocation2 + $0x260] sm:$0xff]
    %v165 = vld [vmem:[#allocation2 + $0x268] sm:$0xff]
    %v166 = vld [vmem:[#allocation2 + $0x270] sm:$0xff]
    %v167 = vld [vmem:[#allocation2 + $0x278] sm:$0xff]
    %v168 = vld [vmem:[#allocation2 + $0x280] sm:$0xff]
    %v169 = vld [vmem:[#allocation2 + $0x288] sm:$0xff]
    %v170 = vld [vmem:[#allocation2 + $0x290] sm:$0xff]
    %v171 = vld [vmem:[#allocation2 + $0x298] sm:$0xff]
    %v172 = vld [vmem:[#allocation2 + $0x2a0] sm:$0xff]
    %v173 = vld [vmem:[#allocation2 + $0x2a8] sm:$0xff]
    %v174 = vld [vmem:[#allocation2 + $0x2b0] sm:$0xff]
    %v175 = vld [vmem:[#allocation2 + $0x2b8] sm:$0xff]
    %v176 = vld [vmem:[#allocation2 + $0x2c0] sm:$0xff]
    %v177 = vld [vmem:[#allocation2 + $0x2c8] sm:$0xff]
    %v178 = vld [vmem:[#allocation2 + $0x2d0] sm:$0xff]
    %v179 = vld [vmem:[#allocation2 + $0x2d8] sm:$0xff]
    %v180 = vld [vmem:[#allocation2 + $0x2e0] sm:$0xff]
    %v181 = vld [vmem:[#allocation2 + $0x2e8] sm:$0xff]
    %v182 = vld [vmem:[#allocation2 + $0x2f0] sm:$0xff]
    %v183 = vld [vmem:[#allocation2 + $0x2f8] sm:$0xff]
    %v184 = vld [vmem:[#allocation2 + $0x300] sm:$0xff]
    %v185 = vld [vmem:[#allocation2 + $0x308] sm:$0xff]
    %v186 = vld [vmem:[#allocation2 + $0x310] sm:$0xff]
    %v187 = vld [vmem:[#allocation2 + $0x318] sm:$0xff]
    %v188 = vld [vmem:[#allocation2 + $0x320] sm:$0xff]
    %v189 = vld [vmem:[#allocation2 + $0x328] sm:$0xff]
    %v190 = vld [vmem:[#allocation2 + $0x330] sm:$0xff]
    %v191 = vld [vmem:[#allocation2 + $0x338] sm:$0xff]
    %v192 = vld [vmem:[#allocation2 + $0x340] sm:$0xff]
    %v193 = vld [vmem:[#allocation2 + $0x348] sm:$0xff]
    %v194 = vld [vmem:[#allocation2 + $0x350] sm:$0xff]
    %v195 = vld [vmem:[#allocation2 + $0x358] sm:$0xff]
    %v196 = vld [vmem:[#allocation2 + $0x360] sm:$0xff]
    %v197 = vld [vmem:[#allocation2 + $0x368] sm:$0xff]
    %v198 = vld [vmem:[#allocation2 + $0x370] sm:$0xff]
    %v199 = vld [vmem:[#allocation2 + $0x378] sm:$0xff]
    %v200 = vld [vmem:[#allocation2 + $0x380] sm:$0xff]
    %v201 = vld [vmem:[#allocation2 + $0x388] sm:$0xff]
    %v202 = vld [vmem:[#allocation2 + $0x390] sm:$0xff]
    %v203 = vld [vmem:[#allocation2 + $0x398] sm:$0xff]
    %v204 = vld [vmem:[#allocation2 + $0x3a0] sm:$0xff]
    %v205 = vld [vmem:[#allocation2 + $0x3a8] sm:$0xff]
    %v206 = vld [vmem:[#allocation2 + $0x3b0] sm:$0xff]
    %v207 = vld [vmem:[#allocation2 + $0x3b8] sm:$0xff]
    %v208 = vld [vmem:[#allocation2 + $0x3c0] sm:$0xff]
    %v209 = vld [vmem:[#allocation2 + $0x3c8] sm:$0xff]
    %v210 = vld [vmem:[#allocation2 + $0x3d0] sm:$0xff]
    %v211 = vld [vmem:[#allocation2 + $0x3d8] sm:$0xff]
    %v212 = vld [vmem:[#allocation2 + $0x3e0] sm:$0xff]
    %v213 = vld [vmem:[#allocation2 + $0x3e8] sm:$0xff]
    %v214 = vld [vmem:[#allocation2 + $0x3f0] sm:$0xff]
    %v215 = vld [vmem:[#allocation2 + $0x3f8] sm:$0xff]
    %v216 = vld [vmem:[#allocation5] sm:$0xff]
    %v217 = vld [vmem:[#allocation5 + $0x8] sm:$0xff]
    %v218 = vld [vmem:[#allocation5 + $0x10] sm:$0xff]
    %v219 = vld [vmem:[#allocation5 + $0x18] sm:$0xff]
    %v220 = vld [vmem:[#allocation5 + $0x20] sm:$0xff]
    %v221 = vld [vmem:[#allocation5 + $0x28] sm:$0xff]
    %v222 = vld [vmem:[#allocation5 + $0x30] sm:$0xff]
    %v223 = vld [vmem:[#allocation5 + $0x38] sm:$0xff]
    %v224 = vld [vmem:[#allocation5 + $0x40] sm:$0xff]
    %v225 = vld [vmem:[#allocation5 + $0x48] sm:$0xff]
    %v226 = vld [vmem:[#allocation5 + $0x50] sm:$0xff]
    %v227 = vld [vmem:[#allocation5 + $0x58] sm:$0xff]
    %v228 = vld [vmem:[#allocation5 + $0x60] sm:$0xff]
    %v229 = vld [vmem:[#allocation5 + $0x68] sm:$0xff]
    %v230 = vld [vmem:[#allocation5 + $0x70] sm:$0xff]
    %v231 = vld [vmem:[#allocation5 + $0x78] sm:$0xff]
    %v232 = vld [vmem:[#allocation5 + $0x80] sm:$0xff]
    %v233 = vld [vmem:[#allocation5 + $0x88] sm:$0xff]
    %v234 = vld [vmem:[#allocation5 + $0x90] sm:$0xff]
    %v235 = vld [vmem:[#allocation5 + $0x98] sm:$0xff]
    %v236 = vld [vmem:[#allocation5 + $0xa0] sm:$0xff]
    %v237 = vld [vmem:[#allocation5 + $0xa8] sm:$0xff]
    %v238 = vld [vmem:[#allocation5 + $0xb0] sm:$0xff]
    %v239 = vld [vmem:[#allocation5 + $0xb8] sm:$0xff]
    %v240 = vld [vmem:[#allocation5 + $0xc0] sm:$0xff]
    %v241 = vld [vmem:[#allocation5 + $0xc8] sm:$0xff]
    %v242 = vld [vmem:[#allocation5 + $0xd0] sm:$0xff]
    %v243 = vld [vmem:[#allocation5 + $0xd8] sm:$0xff]
    %v244 = vld [vmem:[#allocation5 + $0xe0] sm:$0xff]
    %v245 = vld [vmem:[#allocation5 + $0xe8] sm:$0xff]
    %v246 = vld [vmem:[#allocation5 + $0xf0] sm:$0xff]
    %v247 = vld [vmem:[#allocation5 + $0xf8] sm:$0xff]
    %v248 = vld [vmem:[#allocation5 + $0x100] sm:$0xff]
    %v249 = vld [vmem:[#allocation5 + $0x108] sm:$0xff]
    %v250 = vld [vmem:[#allocation5 + $0x110] sm:$0xff]
    %v251 = vld [vmem:[#allocation5 + $0x118] sm:$0xff]
    %v252 = vld [vmem:[#allocation5 + $0x120] sm:$0xff]
    %v253 = vld [vmem:[#allocation5 + $0x128] sm:$0xff]
    %v254 = vld [vmem:[#allocation5 + $0x130] sm:$0xff]
    %v255 = vld [vmem:[#allocation5 + $0x138] sm:$0xff]
    %v256 = vld [vmem:[#allocation5 + $0x140] sm:$0xff]
    %v257 = vld [vmem:[#allocation5 + $0x148] sm:$0xff]
    %v258 = vld [vmem:[#allocation5 + $0x150] sm:$0xff]
    %v259 = vld [vmem:[#allocation5 + $0x158] sm:$0xff]
    %v260 = vld [vmem:[#allocation5 + $0x160] sm:$0xff]
    %v261 = vld [vmem:[#allocation5 + $0x168] sm:$0xff]
    %v262 = vld [vmem:[#allocation5 + $0x170] sm:$0xff]
    %v263 = vld [vmem:[#allocation5 + $0x178] sm:$0xff]
    %v264 = vld [vmem:[#allocation5 + $0x180] sm:$0xff]
    %v265 = vld [vmem:[#allocation5 + $0x188] sm:$0xff]
    %v266 = vld [vmem:[#allocation5 + $0x190] sm:$0xff]
    %v267 = vld [vmem:[#allocation5 + $0x198] sm:$0xff]
    %v268 = vld [vmem:[#allocation5 + $0x1a0] sm:$0xff]
    %v269 = vld [vmem:[#allocation5 + $0x1a8] sm:$0xff]
    %v270 = vld [vmem:[#allocation5 + $0x1b0] sm:$0xff]
    %v271 = vld [vmem:[#allocation5 + $0x1b8] sm:$0xff]
    %v272 = vld [vmem:[#allocation5 + $0x1c0] sm:$0xff]
    %v273 = vld [vmem:[#allocation5 + $0x1c8] sm:$0xff]
    %v274 = vld [vmem:[#allocation5 + $0x1d0] sm:$0xff]
    %v275 = vld [vmem:[#allocation5 + $0x1d8] sm:$0xff]
    %v276 = vld [vmem:[#allocation5 + $0x1e0] sm:$0xff]
    %v277 = vld [vmem:[#allocation5 + $0x1e8] sm:$0xff]
    %v278 = vld [vmem:[#allocation5 + $0x1f0] sm:$0xff]
    %v279 = vld [vmem:[#allocation5 + $0x1f8] sm:$0xff]
    %v280 = vld [vmem:[#allocation5 + $0x200] sm:$0xff]
    %v281 = vld [vmem:[#allocation5 + $0x208] sm:$0xff]
    %v282 = vld [vmem:[#allocation5 + $0x210] sm:$0xff]
    %v283 = vld [vmem:[#allocation5 + $0x218] sm:$0xff]
    %v284 = vld [vmem:[#allocation5 + $0x220] sm:$0xff]
    %v285 = vld [vmem:[#allocation5 + $0x228] sm:$0xff]
    %v286 = vld [vmem:[#allocation5 + $0x230] sm:$0xff]
    %v287 = vld [vmem:[#allocation5 + $0x238] sm:$0xff]
    %v288 = vld [vmem:[#allocation5 + $0x240] sm:$0xff]
    %v289 = vld [vmem:[#allocation5 + $0x248] sm:$0xff]
    %v290 = vld [vmem:[#allocation5 + $0x250] sm:$0xff]
    %v291 = vld [vmem:[#allocation5 + $0x258] sm:$0xff]
    %v292 = vld [vmem:[#allocation5 + $0x260] sm:$0xff]
    %v293 = vld [vmem:[#allocation5 + $0x268] sm:$0xff]
    %v294 = vld [vmem:[#allocation5 + $0x270] sm:$0xff]
    %v295 = vld [vmem:[#allocation5 + $0x278] sm:$0xff]
    %v296 = vld [vmem:[#allocation5 + $0x280] sm:$0xff]
    %v297 = vld [vmem:[#allocation5 + $0x288] sm:$0xff]
    %v298 = vld [vmem:[#allocation5 + $0x290] sm:$0xff]
    %v299 = vld [vmem:[#allocation5 + $0x298] sm:$0xff]
    %v300 = vld [vmem:[#allocation5 + $0x2a0] sm:$0xff]
    %v301 = vld [vmem:[#allocation5 + $0x2a8] sm:$0xff]
    %v302 = vld [vmem:[#allocation5 + $0x2b0] sm:$0xff]
    %v303 = vld [vmem:[#allocation5 + $0x2b8] sm:$0xff]
    %v304 = vld [vmem:[#allocation5 + $0x2c0] sm:$0xff]
    %v305 = vld [vmem:[#allocation5 + $0x2c8] sm:$0xff]
    %v306 = vld [vmem:[#allocation5 + $0x2d0] sm:$0xff]
    %v307 = vld [vmem:[#allocation5 + $0x2d8] sm:$0xff]
    %v308 = vld [vmem:[#allocation5 + $0x2e0] sm:$0xff]
    %v309 = vld [vmem:[#allocation5 + $0x2e8] sm:$0xff]
    %v310 = vld [vmem:[#allocation5 + $0x2f0] sm:$0xff]
    %v311 = vld [vmem:[#allocation5 + $0x2f8] sm:$0xff]
    %v312 = vld [vmem:[#allocation5 + $0x300] sm:$0xff]
    %v313 = vld [vmem:[#allocation5 + $0x308] sm:$0xff]
    %v314 = vld [vmem:[#allocation5 + $0x310] sm:$0xff]
    %v315 = vld [vmem:[#allocation5 + $0x318] sm:$0xff]
    %v316 = vld [vmem:[#allocation5 + $0x320] sm:$0xff]
    %v317 = vld [vmem:[#allocation5 + $0x328] sm:$0xff]
    %v318 = vld [vmem:[#allocation5 + $0x330] sm:$0xff]
    %v319 = vld [vmem:[#allocation5 + $0x338] sm:$0xff]
    %v320 = vld [vmem:[#allocation5 + $0x340] sm:$0xff]
    %v321 = vld [vmem:[#allocation5 + $0x348] sm:$0xff]
    %v322 = vld [vmem:[#allocation5 + $0x350] sm:$0xff]
    %v323 = vld [vmem:[#allocation5 + $0x358] sm:$0xff]
    %v324 = vld [vmem:[#allocation5 + $0x360] sm:$0xff]
    %v325 = vld [vmem:[#allocation5 + $0x368] sm:$0xff]
    %v326 = vld [vmem:[#allocation5 + $0x370] sm:$0xff]
    %v327 = vld [vmem:[#allocation5 + $0x378] sm:$0xff]
    %v328 = vld [vmem:[#allocation5 + $0x380] sm:$0xff]
    %v329 = vld [vmem:[#allocation5 + $0x388] sm:$0xff]
    %v330 = vld [vmem:[#allocation5 + $0x390] sm:$0xff]
    %v331 = vld [vmem:[#allocation5 + $0x398] sm:$0xff]
    %v332 = vld [vmem:[#allocation5 + $0x3a0] sm:$0xff]
    %v333 = vld [vmem:[#allocation5 + $0x3a8] sm:$0xff]
    %v334 = vld [vmem:[#allocation5 + $0x3b0] sm:$0xff]
    %v335 = vld [vmem:[#allocation5 + $0x3b8] sm:$0xff]
    %v336 = vld [vmem:[#allocation5 + $0x3c0] sm:$0xff]
    %v337 = vld [vmem:[#allocation5 + $0x3c8] sm:$0xff]
    %v338 = vld [vmem:[#allocation5 + $0x3d0] sm:$0xff]
    %v339 = vld [vmem:[#allocation5 + $0x3d8] sm:$0xff]
    %v340 = vld [vmem:[#allocation5 + $0x3e0] sm:$0xff]
    %v341 = vld [vmem:[#allocation5 + $0x3e8] sm:$0xff]
    %v342 = vld [vmem:[#allocation5 + $0x3f0] sm:$0xff]
    %v343 = vld [vmem:[#allocation5 + $0x3f8] sm:$0xff]
    %v472 = vunpack.c.l.b16 %v216
    %v473 = vunpack.c.h.b16 %v216
    %v474 = vunpack.c.l.b16 %v217
    %v475 = vunpack.c.h.b16 %v217
    %v476 = vunpack.c.l.b16 %v218
    %v477 = vunpack.c.h.b16 %v218
    %v478 = vunpack.c.l.b16 %v219
    %v479 = vunpack.c.h.b16 %v219
    %v480 = vunpack.c.l.b16 %v220
    %v481 = vunpack.c.h.b16 %v220
    %v482 = vunpack.c.l.b16 %v221
    %v483 = vunpack.c.h.b16 %v221
    %v484 = vunpack.c.l.b16 %v222
    %v485 = vunpack.c.h.b16 %v222
    %v486 = vunpack.c.l.b16 %v223
    %v487 = vunpack.c.h.b16 %v223
    %v488 = vunpack.c.l.b16 %v224
    %v489 = vunpack.c.h.b16 %v224
    %v490 = vunpack.c.l.b16 %v225
    %v491 = vunpack.c.h.b16 %v225
    %v492 = vunpack.c.l.b16 %v226
    %v493 = vunpack.c.h.b16 %v226
    %v494 = vunpack.c.l.b16 %v227
    %v495 = vunpack.c.h.b16 %v227
    %v496 = vunpack.c.l.b16 %v228
    %v497 = vunpack.c.h.b16 %v228
    %v498 = vunpack.c.l.b16 %v229
    %v499 = vunpack.c.h.b16 %v229
    %v500 = vunpack.c.l.b16 %v230
    %v501 = vunpack.c.h.b16 %v230
    %v502 = vunpack.c.l.b16 %v231
    %v503 = vunpack.c.h.b16 %v231
    %v504 = vunpack.c.l.b16 %v232
    %v505 = vunpack.c.h.b16 %v232
    %v506 = vunpack.c.l.b16 %v233
    %v507 = vunpack.c.h.b16 %v233
    %v508 = vunpack.c.l.b16 %v234
    %v509 = vunpack.c.h.b16 %v234
    %v510 = vunpack.c.l.b16 %v235
    %v511 = vunpack.c.h.b16 %v235
    %v512 = vunpack.c.l.b16 %v236
    %v513 = vunpack.c.h.b16 %v236
    %v514 = vunpack.c.l.b16 %v237
    %v515 = vunpack.c.h.b16 %v237
    %v516 = vunpack.c.l.b16 %v238
    %v517 = vunpack.c.h.b16 %v238
    %v518 = vunpack.c.l.b16 %v239
    %v519 = vunpack.c.h.b16 %v239
    %v520 = vunpack.c.l.b16 %v240
    %v521 = vunpack.c.h.b16 %v240
    %v522 = vunpack.c.l.b16 %v241
    %v523 = vunpack.c.h.b16 %v241
    %v524 = vunpack.c.l.b16 %v242
    %v525 = vunpack.c.h.b16 %v242
    %v526 = vunpack.c.l.b16 %v243
    %v527 = vunpack.c.h.b16 %v243
    %v528 = vunpack.c.l.b16 %v244
    %v529 = vunpack.c.h.b16 %v244
    %v530 = vunpack.c.l.b16 %v245
    %v531 = vunpack.c.h.b16 %v245
    %v532 = vunpack.c.l.b16 %v246
    %v533 = vunpack.c.h.b16 %v246
    %v534 = vunpack.c.l.b16 %v247
    %v535 = vunpack.c.h.b16 %v247
    %v536 = vunpack.c.l.b16 %v248
    %v537 = vunpack.c.h.b16 %v248
    %v538 = vunpack.c.l.b16 %v249
    %v539 = vunpack.c.h.b16 %v249
    %v540 = vunpack.c.l.b16 %v250
    %v541 = vunpack.c.h.b16 %v250
    %v542 = vunpack.c.l.b16 %v251
    %v543 = vunpack.c.h.b16 %v251
    %v544 = vunpack.c.l.b16 %v252
    %v545 = vunpack.c.h.b16 %v252
    %v546 = vunpack.c.l.b16 %v253
    %v547 = vunpack.c.h.b16 %v253
    %v548 = vunpack.c.l.b16 %v254
    %v549 = vunpack.c.h.b16 %v254
    %v550 = vunpack.c.l.b16 %v255
    %v551 = vunpack.c.h.b16 %v255
    %v552 = vunpack.c.l.b16 %v256
    %v553 = vunpack.c.h.b16 %v256
    %v554 = vunpack.c.l.b16 %v257
    %v555 = vunpack.c.h.b16 %v257
    %v556 = vunpack.c.l.b16 %v258
    %v557 = vunpack.c.h.b16 %v258
    %v558 = vunpack.c.l.b16 %v259
    %v559 = vunpack.c.h.b16 %v259
    %v560 = vunpack.c.l.b16 %v260
    %v561 = vunpack.c.h.b16 %v260
    %v562 = vunpack.c.l.b16 %v261
    %v563 = vunpack.c.h.b16 %v261
    %v564 = vunpack.c.l.b16 %v262
    %v565 = vunpack.c.h.b16 %v262
    %v566 = vunpack.c.l.b16 %v263
    %v567 = vunpack.c.h.b16 %v263
    %v568 = vunpack.c.l.b16 %v264
    %v569 = vunpack.c.h.b16 %v264
    %v570 = vunpack.c.l.b16 %v265
    %v571 = vunpack.c.h.b16 %v265
    %v572 = vunpack.c.l.b16 %v266
    %v573 = vunpack.c.h.b16 %v266
    %v574 = vunpack.c.l.b16 %v267
    %v575 = vunpack.c.h.b16 %v267
    %v576 = vunpack.c.l.b16 %v268
    %v577 = vunpack.c.h.b16 %v268
    %v578 = vunpack.c.l.b16 %v269
    %v579 = vunpack.c.h.b16 %v269
    %v580 = vunpack.c.l.b16 %v270
    %v581 = vunpack.c.h.b16 %v270
    %v582 = vunpack.c.l.b16 %v271
    %v583 = vunpack.c.h.b16 %v271
    %v584 = vunpack.c.l.b16 %v272
    %v585 = vunpack.c.h.b16 %v272
    %v586 = vunpack.c.l.b16 %v273
    %v587 = vunpack.c.h.b16 %v273
    %v588 = vunpack.c.l.b16 %v274
    %v589 = vunpack.c.h.b16 %v274
    %v590 = vunpack.c.l.b16 %v275
    %v591 = vunpack.c.h.b16 %v275
    %v592 = vunpack.c.l.b16 %v276
    %v593 = vunpack.c.h.b16 %v276
    %v594 = vunpack.c.l.b16 %v277
    %v595 = vunpack.c.h.b16 %v277
    %v596 = vunpack.c.l.b16 %v278
    %v597 = vunpack.c.h.b16 %v278
    %v598 = vunpack.c.l.b16 %v279
    %v599 = vunpack.c.h.b16 %v279
    %v600 = vunpack.c.l.b16 %v280
    %v601 = vunpack.c.h.b16 %v280
    %v602 = vunpack.c.l.b16 %v281
    %v603 = vunpack.c.h.b16 %v281
    %v604 = vunpack.c.l.b16 %v282
    %v605 = vunpack.c.h.b16 %v282
    %v606 = vunpack.c.l.b16 %v283
    %v607 = vunpack.c.h.b16 %v283
    %v608 = vunpack.c.l.b16 %v284
    %v609 = vunpack.c.h.b16 %v284
    %v610 = vunpack.c.l.b16 %v285
    %v611 = vunpack.c.h.b16 %v285
    %v612 = vunpack.c.l.b16 %v286
    %v613 = vunpack.c.h.b16 %v286
    %v614 = vunpack.c.l.b16 %v287
    %v615 = vunpack.c.h.b16 %v287
    %v616 = vunpack.c.l.b16 %v288
    %v617 = vunpack.c.h.b16 %v288
    %v618 = vunpack.c.l.b16 %v289
    %v619 = vunpack.c.h.b16 %v289
    %v620 = vunpack.c.l.b16 %v290
    %v621 = vunpack.c.h.b16 %v290
    %v622 = vunpack.c.l.b16 %v291
    %v623 = vunpack.c.h.b16 %v291
    %v624 = vunpack.c.l.b16 %v292
    %v625 = vunpack.c.h.b16 %v292
    %v626 = vunpack.c.l.b16 %v293
    %v627 = vunpack.c.h.b16 %v293
    %v628 = vunpack.c.l.b16 %v294
    %v629 = vunpack.c.h.b16 %v294
    %v630 = vunpack.c.l.b16 %v295
    %v631 = vunpack.c.h.b16 %v295
    %v632 = vunpack.c.l.b16 %v296
    %v633 = vunpack.c.h.b16 %v296
    %v634 = vunpack.c.l.b16 %v297
    %v635 = vunpack.c.h.b16 %v297
    %v636 = vunpack.c.l.b16 %v298
    %v637 = vunpack.c.h.b16 %v298
    %v638 = vunpack.c.l.b16 %v299
    %v639 = vunpack.c.h.b16 %v299
    %v640 = vunpack.c.l.b16 %v300
    %v641 = vunpack.c.h.b16 %v300
    %v642 = vunpack.c.l.b16 %v301
    %v643 = vunpack.c.h.b16 %v301
    %v644 = vunpack.c.l.b16 %v302
    %v645 = vunpack.c.h.b16 %v302
    %v646 = vunpack.c.l.b16 %v303
    %v647 = vunpack.c.h.b16 %v303
    %v648 = vunpack.c.l.b16 %v304
    %v649 = vunpack.c.h.b16 %v304
    %v650 = vunpack.c.l.b16 %v305
    %v651 = vunpack.c.h.b16 %v305
    %v652 = vunpack.c.l.b16 %v306
    %v653 = vunpack.c.h.b16 %v306
    %v654 = vunpack.c.l.b16 %v307
    %v655 = vunpack.c.h.b16 %v307
    %v656 = vunpack.c.l.b16 %v308
    %v657 = vunpack.c.h.b16 %v308
    %v658 = vunpack.c.l.b16 %v309
    %v659 = vunpack.c.h.b16 %v309
    %v660 = vunpack.c.l.b16 %v310
    %v661 = vunpack.c.h.b16 %v310
    %v662 = vunpack.c.l.b16 %v311
    %v663 = vunpack.c.h.b16 %v311
    %v664 = vunpack.c.l.b16 %v312
    %v665 = vunpack.c.h.b16 %v312
    %v666 = vunpack.c.l.b16 %v313
    %v667 = vunpack.c.h.b16 %v313
    %v668 = vunpack.c.l.b16 %v314
    %v669 = vunpack.c.h.b16 %v314
    %v670 = vunpack.c.l.b16 %v315
    %v671 = vunpack.c.h.b16 %v315
    %v672 = vunpack.c.l.b16 %v316
    %v673 = vunpack.c.h.b16 %v316
    %v674 = vunpack.c.l.b16 %v317
    %v675 = vunpack.c.h.b16 %v317
    %v676 = vunpack.c.l.b16 %v318
    %v677 = vunpack.c.h.b16 %v318
    %v678 = vunpack.c.l.b16 %v319
    %v679 = vunpack.c.h.b16 %v319
    %v680 = vunpack.c.l.b16 %v320
    %v681 = vunpack.c.h.b16 %v320
    %v682 = vunpack.c.l.b16 %v321
    %v683 = vunpack.c.h.b16 %v321
    %v684 = vunpack.c.l.b16 %v322
    %v685 = vunpack.c.h.b16 %v322
    %v686 = vunpack.c.l.b16 %v323
    %v687 = vunpack.c.h.b16 %v323
    %v688 = vunpack.c.l.b16 %v324
    %v689 = vunpack.c.h.b16 %v324
    %v690 = vunpack.c.l.b16 %v325
    %v691 = vunpack.c.h.b16 %v325
    %v692 = vunpack.c.l.b16 %v326
    %v693 = vunpack.c.h.b16 %v326
    %v694 = vunpack.c.l.b16 %v327
    %v695 = vunpack.c.h.b16 %v327
    %v696 = vunpack.c.l.b16 %v328
    %v697 = vunpack.c.h.b16 %v328
    %v698 = vunpack.c.l.b16 %v329
    %v699 = vunpack.c.h.b16 %v329
    %v700 = vunpack.c.l.b16 %v330
    %v701 = vunpack.c.h.b16 %v330
    %v702 = vunpack.c.l.b16 %v331
    %v703 = vunpack.c.h.b16 %v331
    %v704 = vunpack.c.l.b16 %v332
    %v705 = vunpack.c.h.b16 %v332
    %v706 = vunpack.c.l.b16 %v333
    %v707 = vunpack.c.h.b16 %v333
    %v708 = vunpack.c.l.b16 %v334
    %v709 = vunpack.c.h.b16 %v334
    %v710 = vunpack.c.l.b16 %v335
    %v711 = vunpack.c.h.b16 %v335
    %v712 = vunpack.c.l.b16 %v336
    %v713 = vunpack.c.h.b16 %v336
    %v714 = vunpack.c.l.b16 %v337
    %v715 = vunpack.c.h.b16 %v337
    %v716 = vunpack.c.l.b16 %v338
    %v717 = vunpack.c.h.b16 %v338
    %v718 = vunpack.c.l.b16 %v339
    %v719 = vunpack.c.h.b16 %v339
    %v720 = vunpack.c.l.b16 %v340
    %v721 = vunpack.c.h.b16 %v340
    %v722 = vunpack.c.l.b16 %v341
    %v723 = vunpack.c.h.b16 %v341
    %v724 = vunpack.c.l.b16 %v342
    %v725 = vunpack.c.h.b16 %v342
    %v726 = vunpack.c.l.b16 %v343
    %v727 = vunpack.c.h.b16 %v343
    %v728 = vpack.c.b16 %v480, %v472
    %v729 = vpack.c.b16 %v481, %v473
    %v730 = vpack.c.b16 %v482, %v474
    %v731 = vpack.c.b16 %v483, %v475
    %v732 = vpack.c.b16 %v484, %v476
    %v733 = vpack.c.b16 %v485, %v477
    %v734 = vpack.c.b16 %v486, %v478
    %v735 = vpack.c.b16 %v487, %v479
    %v736 = vpack.c.b16 %v496, %v488
    %v737 = vpack.c.b16 %v497, %v489
    %v738 = vpack.c.b16 %v498, %v490
    %v739 = vpack.c.b16 %v499, %v491
    %v740 = vpack.c.b16 %v500, %v492
    %v741 = vpack.c.b16 %v501, %v493
    %v742 = vpack.c.b16 %v502, %v494
    %v743 = vpack.c.b16 %v503, %v495
    %v744 = vpack.c.b16 %v512, %v504
    %v745 = vpack.c.b16 %v513, %v505
    %v746 = vpack.c.b16 %v514, %v506
    %v747 = vpack.c.b16 %v515, %v507
    %v748 = vpack.c.b16 %v516, %v508
    %v749 = vpack.c.b16 %v517, %v509
    %v750 = vpack.c.b16 %v518, %v510
    %v751 = vpack.c.b16 %v519, %v511
    %v752 = vpack.c.b16 %v528, %v520
    %v753 = vpack.c.b16 %v529, %v521
    %v754 = vpack.c.b16 %v530, %v522
    %v755 = vpack.c.b16 %v531, %v523
    %v756 = vpack.c.b16 %v532, %v524
    %v757 = vpack.c.b16 %v533, %v525
    %v758 = vpack.c.b16 %v534, %v526
    %v759 = vpack.c.b16 %v535, %v527
    %v760 = vpack.c.b16 %v544, %v536
    %v761 = vpack.c.b16 %v545, %v537
    %v762 = vpack.c.b16 %v546, %v538
    %v763 = vpack.c.b16 %v547, %v539
    %v764 = vpack.c.b16 %v548, %v540
    %v765 = vpack.c.b16 %v549, %v541
    %v766 = vpack.c.b16 %v550, %v542
    %v767 = vpack.c.b16 %v551, %v543
    %v768 = vpack.c.b16 %v560, %v552
    %v769 = vpack.c.b16 %v561, %v553
    %v770 = vpack.c.b16 %v562, %v554
    %v771 = vpack.c.b16 %v563, %v555
    %v772 = vpack.c.b16 %v564, %v556
    %v773 = vpack.c.b16 %v565, %v557
    %v774 = vpack.c.b16 %v566, %v558
    %v775 = vpack.c.b16 %v567, %v559
    %v776 = vpack.c.b16 %v576, %v568
    %v777 = vpack.c.b16 %v577, %v569
    %v778 = vpack.c.b16 %v578, %v570
    %v779 = vpack.c.b16 %v579, %v571
    %v780 = vpack.c.b16 %v580, %v572
    %v781 = vpack.c.b16 %v581, %v573
    %v782 = vpack.c.b16 %v582, %v574
    %v783 = vpack.c.b16 %v583, %v575
    %v784 = vpack.c.b16 %v592, %v584
    %v785 = vpack.c.b16 %v593, %v585
    %v786 = vpack.c.b16 %v594, %v586
    %v787 = vpack.c.b16 %v595, %v587
    %v788 = vpack.c.b16 %v596, %v588
    %v789 = vpack.c.b16 %v597, %v589
    %v790 = vpack.c.b16 %v598, %v590
    %v791 = vpack.c.b16 %v599, %v591
    %v792 = vpack.c.b16 %v608, %v600
    %v793 = vpack.c.b16 %v609, %v601
    %v794 = vpack.c.b16 %v610, %v602
    %v795 = vpack.c.b16 %v611, %v603
    %v796 = vpack.c.b16 %v612, %v604
    %v797 = vpack.c.b16 %v613, %v605
    %v798 = vpack.c.b16 %v614, %v606
    %v799 = vpack.c.b16 %v615, %v607
    %v800 = vpack.c.b16 %v624, %v616
    %v801 = vpack.c.b16 %v625, %v617
    %v802 = vpack.c.b16 %v626, %v618
    %v803 = vpack.c.b16 %v627, %v619
    %v804 = vpack.c.b16 %v628, %v620
    %v805 = vpack.c.b16 %v629, %v621
    %v806 = vpack.c.b16 %v630, %v622
    %v807 = vpack.c.b16 %v631, %v623
    %v808 = vpack.c.b16 %v640, %v632
    %v809 = vpack.c.b16 %v641, %v633
    %v810 = vpack.c.b16 %v642, %v634
    %v811 = vpack.c.b16 %v643, %v635
    %v812 = vpack.c.b16 %v644, %v636
    %v813 = vpack.c.b16 %v645, %v637
    %v814 = vpack.c.b16 %v646, %v638
    %v815 = vpack.c.b16 %v647, %v639
    %v816 = vpack.c.b16 %v656, %v648
    %v817 = vpack.c.b16 %v657, %v649
    %v818 = vpack.c.b16 %v658, %v650
    %v819 = vpack.c.b16 %v659, %v651
    %v820 = vpack.c.b16 %v660, %v652
    %v821 = vpack.c.b16 %v661, %v653
    %v822 = vpack.c.b16 %v662, %v654
    %v823 = vpack.c.b16 %v663, %v655
    %v824 = vpack.c.b16 %v672, %v664
    %v825 = vpack.c.b16 %v673, %v665
    %v826 = vpack.c.b16 %v674, %v666
    %v827 = vpack.c.b16 %v675, %v667
    %v828 = vpack.c.b16 %v676, %v668
    %v829 = vpack.c.b16 %v677, %v669
    %v830 = vpack.c.b16 %v678, %v670
    %v831 = vpack.c.b16 %v679, %v671
    %v832 = vpack.c.b16 %v688, %v680
    %v833 = vpack.c.b16 %v689, %v681
    %v834 = vpack.c.b16 %v690, %v682
    %v835 = vpack.c.b16 %v691, %v683
    %v836 = vpack.c.b16 %v692, %v684
    %v837 = vpack.c.b16 %v693, %v685
    %v838 = vpack.c.b16 %v694, %v686
    %v839 = vpack.c.b16 %v695, %v687
    %v840 = vpack.c.b16 %v704, %v696
    %v841 = vpack.c.b16 %v705, %v697
    %v842 = vpack.c.b16 %v706, %v698
    %v843 = vpack.c.b16 %v707, %v699
    %v844 = vpack.c.b16 %v708, %v700
    %v845 = vpack.c.b16 %v709, %v701
    %v846 = vpack.c.b16 %v710, %v702
    %v847 = vpack.c.b16 %v711, %v703
    %v848 = vpack.c.b16 %v720, %v712
    %v849 = vpack.c.b16 %v721, %v713
    %v850 = vpack.c.b16 %v722, %v714
    %v851 = vpack.c.b16 %v723, %v715
    %v852 = vpack.c.b16 %v724, %v716
    %v853 = vpack.c.b16 %v725, %v717
    %v854 = vpack.c.b16 %v726, %v718
    %v855 = vpack.c.b16 %v727, %v719
    %984 = vmatprep.subr.bf16.mxu0 %v729
    %985 = vmatpush1.bf16.msra.mxu0 %v728
    %986 = vmatprep.subr.bf16.mxu0 %v737
    %987 = vmatpush1.bf16.msra.mxu0 %v736
    %988 = vmatprep.subr.bf16.mxu0 %v745
    %989 = vmatpush1.bf16.msra.mxu0 %v744
    %990 = vmatprep.subr.bf16.mxu0 %v753
    %991 = vmatpush1.bf16.msra.mxu0 %v752
    %992 = vmatprep.subr.bf16.mxu0 %v761
    %993 = vmatpush1.bf16.msra.mxu0 %v760
    %994 = vmatprep.subr.bf16.mxu0 %v769
    %995 = vmatpush1.bf16.msra.mxu0 %v768
    %996 = vmatprep.subr.bf16.mxu0 %v777
    %997 = vmatpush1.bf16.msra.mxu0 %v776
    %998 = vmatprep.subr.bf16.mxu0 %v785
    %999 = vmatpush1.bf16.msra.mxu0 %v784
    %1000 = vmatprep.subr.bf16.mxu0 %v793
    %1001 = vmatpush1.bf16.msra.mxu0 %v792
    %1002 = vmatprep.subr.bf16.mxu0 %v801
    %1003 = vmatpush1.bf16.msra.mxu0 %v800
    %1004 = vmatprep.subr.bf16.mxu0 %v809
    %1005 = vmatpush1.bf16.msra.mxu0 %v808
    %1006 = vmatprep.subr.bf16.mxu0 %v817
    %1007 = vmatpush1.bf16.msra.mxu0 %v816
    %1008 = vmatprep.subr.bf16.mxu0 %v825
    %1009 = vmatpush1.bf16.msra.mxu0 %v824
    %1010 = vmatprep.subr.bf16.mxu0 %v833
    %1011 = vmatpush1.bf16.msra.mxu0 %v832
    %1012 = vmatprep.subr.bf16.mxu0 %v841
    %1013 = vmatpush1.bf16.msra.mxu0 %v840
    %1014 = vmatprep.subr.bf16.mxu0 %v849
    %1015 = vmatpush1.bf16.msra.mxu0 %v848
    %1016 = vmatprep.mubr.bf16.mxu0 %v65
    %1017 = vmatmul.mubr.bf16.gmra.mrb[0].mxu0 %v64
    %v1018 = vpop.f32.mrb[0].mxu0
    %v1019 = vadd.f32 0.0, %v1018
    %v1020 = vpop.f32.mrb[0].mxu0
    %v1021 = vadd.f32 0.0, %v1020
    %v1022 = vpop.f32.mrb[0].mxu0
    %v1023 = vadd.f32 0.0, %v1022
    %v1024 = vpop.f32.mrb[0].mxu0
    %v1025 = vadd.f32 0.0, %v1024
    %1026 = vmatprep.mubr.bf16.mxu0 %v67
    %1027 = vmatmul.mubr.bf16.gmra.mrb[0].mxu0 %v66
    %v1028 = vpop.f32.mrb[0].mxu0
    %v1029 = vadd.f32 0.0, %v1028
    %v1030 = vpop.f32.mrb[0].mxu0
    %v1031 = vadd.f32 0.0, %v1030
    %v1032 = vpop.f32.mrb[0].mxu0
    %v1033 = vadd.f32 0.0, %v1032
    %v1034 = vpop.f32.mrb[0].mxu0
    %v1035 = vadd.f32 0.0, %v1034
    %1036 = vdwg.mxu0
    %1037 = vmatprep.subr.bf16.mxu0 %v731
    %1038 = vmatpush1.bf16.msra.mxu0 %v730
    %1039 = vmatprep.subr.bf16.mxu0 %v739
    %1040 = vmatpush1.bf16.msra.mxu0 %v738
    %1041 = vmatprep.subr.bf16.mxu0 %v747
    %1042 = vmatpush1.bf16.msra.mxu0 %v746
    %1043 = vmatprep.subr.bf16.mxu0 %v755
    %1044 = vmatpush1.bf16.msra.mxu0 %v754
    %1045 = vmatprep.subr.bf16.mxu0 %v763
    %1046 = vmatpush1.bf16.msra.mxu0 %v762
    %1047 = vmatprep.subr.bf16.mxu0 %v771
    %1048 = vmatpush1.bf16.msra.mxu0 %v770
    %1049 = vmatprep.subr.bf16.mxu0 %v779
    %1050 = vmatpush1.bf16.msra.mxu0 %v778
    %1051 = vmatprep.subr.bf16.mxu0 %v787
    %1052 = vmatpush1.bf16.msra.mxu0 %v786
    %1053 = vmatprep.subr.bf16.mxu0 %v795
    %1054 = vmatpush1.bf16.msra.mxu0 %v794
    %1055 = vmatprep.subr.bf16.mxu0 %v803
    %1056 = vmatpush1.bf16.msra.mxu0 %v802
    %1057 = vmatprep.subr.bf16.mxu0 %v811
    %1058 = vmatpush1.bf16.msra.mxu0 %v810
    %1059 = vmatprep.subr.bf16.mxu0 %v819
    %1060 = vmatpush1.bf16.msra.mxu0 %v818
    %1061 = vmatprep.subr.bf16.mxu0 %v827
    %1062 = vmatpush1.bf16.msra.mxu0 %v826
    %1063 = vmatprep.subr.bf16.mxu0 %v835
    %1064 = vmatpush1.bf16.msra.mxu0 %v834
    %1065 = vmatprep.subr.bf16.mxu0 %v843
    %1066 = vmatpush1.bf16.msra.mxu0 %v842
    %1067 = vmatprep.subr.bf16.mxu0 %v851
    %1068 = vmatpush1.bf16.msra.mxu0 %v850
    %1069 = vmatprep.mubr.bf16.mxu0 %v65
    %1070 = vmatmul.mubr.bf16.gmra.mrb[0].mxu0 %v64
    %v1071 = vpop.f32.mrb[0].mxu0
    %v1072 = vadd.f32 0.0, %v1071
    %v1073 = vpop.f32.mrb[0].mxu0
    %v1074 = vadd.f32 0.0, %v1073
    %v1075 = vpop.f32.mrb[0].mxu0
    %v1076 = vadd.f32 0.0, %v1075
    %v1077 = vpop.f32.mrb[0].mxu0
    %v1078 = vadd.f32 0.0, %v1077
    %1079 = vmatprep.mubr.bf16.mxu0 %v67
    %1080 = vmatmul.mubr.bf16.gmra.mrb[0].mxu0 %v66
    %v1081 = vpop.f32.mrb[0].mxu0
    %v1082 = vadd.f32 0.0, %v1081
    %v1083 = vpop.f32.mrb[0].mxu0
    %v1084 = vadd.f32 0.0, %v1083
    %v1085 = vpop.f32.mrb[0].mxu0
    %v1086 = vadd.f32 0.0, %v1085
    %v1087 = vpop.f32.mrb[0].mxu0
    %v1088 = vadd.f32 0.0, %v1087
    %1089 = vdwg.mxu0
    %1090 = vmatprep.subr.bf16.mxu0 %v733
    %1091 = vmatpush1.bf16.msra.mxu0 %v732
    %1092 = vmatprep.subr.bf16.mxu0 %v741
    %1093 = vmatpush1.bf16.msra.mxu0 %v740
    %1094 = vmatprep.subr.bf16.mxu0 %v749
    %1095 = vmatpush1.bf16.msra.mxu0 %v748
    %1096 = vmatprep.subr.bf16.mxu0 %v757
    %1097 = vmatpush1.bf16.msra.mxu0 %v756
    %1098 = vmatprep.subr.bf16.mxu0 %v765
    %1099 = vmatpush1.bf16.msra.mxu0 %v764
    %1100 = vmatprep.subr.bf16.mxu0 %v773
    %1101 = vmatpush1.bf16.msra.mxu0 %v772
    %1102 = vmatprep.subr.bf16.mxu0 %v781
    %1103 = vmatpush1.bf16.msra.mxu0 %v780
    %1104 = vmatprep.subr.bf16.mxu0 %v789
    %1105 = vmatpush1.bf16.msra.mxu0 %v788
    %1106 = vmatprep.subr.bf16.mxu0 %v797
    %1107 = vmatpush1.bf16.msra.mxu0 %v796
    %1108 = vmatprep.subr.bf16.mxu0 %v805
    %1109 = vmatpush1.bf16.msra.mxu0 %v804
    %1110 = vmatprep.subr.bf16.mxu0 %v813
    %1111 = vmatpush1.bf16.msra.mxu0 %v812
    %1112 = vmatprep.subr.bf16.mxu0 %v821
    %1113 = vmatpush1.bf16.msra.mxu0 %v820
    %1114 = vmatprep.subr.bf16.mxu0 %v829
    %1115 = vmatpush1.bf16.msra.mxu0 %v828
    %1116 = vmatprep.subr.bf16.mxu0 %v837
    %1117 = vmatpush1.bf16.msra.mxu0 %v836
    %1118 = vmatprep.subr.bf16.mxu0 %v845
    %1119 = vmatpush1.bf16.msra.mxu0 %v844
    %1120 = vmatprep.subr.bf16.mxu0 %v853
    %1121 = vmatpush1.bf16.msra.mxu0 %v852
    %1122 = vmatprep.mubr.bf16.mxu0 %v65
    %1123 = vmatmul.mubr.bf16.gmra.mrb[0].mxu0 %v64
    %v1124 = vpop.f32.mrb[0].mxu0
    %v1125 = vadd.f32 0.0, %v1124
    %v1126 = vpop.f32.mrb[0].mxu0
    %v1127 = vadd.f32 0.0, %v1126
    %v1128 = vpop.f32.mrb[0].mxu0
    %v1129 = vadd.f32 0.0, %v1128
    %v1130 = vpop.f32.mrb[0].mxu0
    %v1131 = vadd.f32 0.0, %v1130
    %1132 = vmatprep.mubr.bf16.mxu0 %v67
    %1133 = vmatmul.mubr.bf16.gmra.mrb[0].mxu0 %v66
    %v1134 = vpop.f32.mrb[0].mxu0
    %v1135 = vadd.f32 0.0, %v1134
    %v1136 = vpop.f32.mrb[0].mxu0
    %v1137 = vadd.f32 0.0, %v1136
    %v1138 = vpop.f32.mrb[0].mxu0
    %v1139 = vadd.f32 0.0, %v1138
    %v1140 = vpop.f32.mrb[0].mxu0
    %v1141 = vadd.f32 0.0, %v1140
    %1142 = vdwg.mxu0
    %1143 = vmatprep.subr.bf16.mxu0 %v735
    %1144 = vmatpush1.bf16.msra.mxu0 %v734
    %1145 = vmatprep.subr.bf16.mxu0 %v743
    %1146 = vmatpush1.bf16.msra.mxu0 %v742
    %1147 = vmatprep.subr.bf16.mxu0 %v751
    %1148 = vmatpush1.bf16.msra.mxu0 %v750
    %1149 = vmatprep.subr.bf16.mxu0 %v759
    %1150 = vmatpush1.bf16.msra.mxu0 %v758
    %1151 = vmatprep.subr.bf16.mxu0 %v767
    %1152 = vmatpush1.bf16.msra.mxu0 %v766
    %1153 = vmatprep.subr.bf16.mxu0 %v775
    %1154 = vmatpush1.bf16.msra.mxu0 %v774
    %1155 = vmatprep.subr.bf16.mxu0 %v783
    %1156 = vmatpush1.bf16.msra.mxu0 %v782
    %1157 = vmatprep.subr.bf16.mxu0 %v791
    %1158 = vmatpush1.bf16.msra.mxu0 %v790
    %1159 = vmatprep.subr.bf16.mxu0 %v799
    %1160 = vmatpush1.bf16.msra.mxu0 %v798
    %1161 = vmatprep.subr.bf16.mxu0 %v807
    %1162 = vmatpush1.bf16.msra.mxu0 %v806
    %1163 = vmatprep.subr.bf16.mxu0 %v815
    %1164 = vmatpush1.bf16.msra.mxu0 %v814
    %1165 = vmatprep.subr.bf16.mxu0 %v823
    %1166 = vmatpush1.bf16.msra.mxu0 %v822
    %1167 = vmatprep.subr.bf16.mxu0 %v831
    %1168 = vmatpush1.bf16.msra.mxu0 %v830
    %1169 = vmatprep.subr.bf16.mxu0 %v839
    %1170 = vmatpush1.bf16.msra.mxu0 %v838
    %1171 = vmatprep.subr.bf16.mxu0 %v847
    %1172 = vmatpush1.bf16.msra.mxu0 %v846
    %1173 = vmatprep.subr.bf16.mxu0 %v855
    %1174 = vmatpush1.bf16.msra.mxu0 %v854
    %1175 = vmatprep.mubr.bf16.mxu0 %v65
    %1176 = vmatmul.mubr.bf16.gmra.mrb[0].mxu0 %v64
    %v1177 = vpop.f32.mrb[0].mxu0
    %v1178 = vadd.f32 0.0, %v1177
    %v1179 = vpop.f32.mrb[0].mxu0
    %v1180 = vadd.f32 0.0, %v1179
    %v1181 = vpop.f32.mrb[0].mxu0
    %v1182 = vadd.f32 0.0, %v1181
    %v1183 = vpop.f32.mrb[0].mxu0
    %v1184 = vadd.f32 0.0, %v1183
    %1185 = vmatprep.mubr.bf16.mxu0 %v67
    %1186 = vmatmul.mubr.bf16.gmra.mrb[0].mxu0 %v66
    %v1187 = vpop.f32.mrb[0].mxu0
    %v1188 = vadd.f32 0.0, %v1187
    %v1189 = vpop.f32.mrb[0].mxu0
    %v1190 = vadd.f32 0.0, %v1189
    %v1191 = vpop.f32.mrb[0].mxu0
    %v1192 = vadd.f32 0.0, %v1191
    %v1193 = vpop.f32.mrb[0].mxu0
    %v1194 = vadd.f32 0.0, %v1193
    %1195 = vdwg.mxu0
    %v1324 = vunpack.c.l.b16 %v88
    %v1325 = vunpack.c.h.b16 %v88
    %v1326 = vunpack.c.l.b16 %v89
    %v1327 = vunpack.c.h.b16 %v89
    %v1328 = vunpack.c.l.b16 %v90
    %v1329 = vunpack.c.h.b16 %v90
    %v1330 = vunpack.c.l.b16 %v91
    %v1331 = vunpack.c.h.b16 %v91
    %v1332 = vunpack.c.l.b16 %v92
    %v1333 = vunpack.c.h.b16 %v92
    %v1334 = vunpack.c.l.b16 %v93
    %v1335 = vunpack.c.h.b16 %v93
    %v1336 = vunpack.c.l.b16 %v94
    %v1337 = vunpack.c.h.b16 %v94
    %v1338 = vunpack.c.l.b16 %v95
    %v1339 = vunpack.c.h.b16 %v95
    %v1340 = vunpack.c.l.b16 %v96
    %v1341 = vunpack.c.h.b16 %v96
    %v1342 = vunpack.c.l.b16 %v97
    %v1343 = vunpack.c.h.b16 %v97
    %v1344 = vunpack.c.l.b16 %v98
    %v1345 = vunpack.c.h.b16 %v98
    %v1346 = vunpack.c.l.b16 %v99
    %v1347 = vunpack.c.h.b16 %v99
    %v1348 = vunpack.c.l.b16 %v100
    %v1349 = vunpack.c.h.b16 %v100
    %v1350 = vunpack.c.l.b16 %v101
    %v1351 = vunpack.c.h.b16 %v101
    %v1352 = vunpack.c.l.b16 %v102
    %v1353 = vunpack.c.h.b16 %v102
    %v1354 = vunpack.c.l.b16 %v103
    %v1355 = vunpack.c.h.b16 %v103
    %v1356 = vunpack.c.l.b16 %v104
    %v1357 = vunpack.c.h.b16 %v104
    %v1358 = vunpack.c.l.b16 %v105
    %v1359 = vunpack.c.h.b16 %v105
    %v1360 = vunpack.c.l.b16 %v106
    %v1361 = vunpack.c.h.b16 %v106
    %v1362 = vunpack.c.l.b16 %v107
    %v1363 = vunpack.c.h.b16 %v107
    %v1364 = vunpack.c.l.b16 %v108
    %v1365 = vunpack.c.h.b16 %v108
    %v1366 = vunpack.c.l.b16 %v109
    %v1367 = vunpack.c.h.b16 %v109
    %v1368 = vunpack.c.l.b16 %v110
    %v1369 = vunpack.c.h.b16 %v110
    %v1370 = vunpack.c.l.b16 %v111
    %v1371 = vunpack.c.h.b16 %v111
    %v1372 = vunpack.c.l.b16 %v112
    %v1373 = vunpack.c.h.b16 %v112
    %v1374 = vunpack.c.l.b16 %v113
    %v1375 = vunpack.c.h.b16 %v113
    %v1376 = vunpack.c.l.b16 %v114
    %v1377 = vunpack.c.h.b16 %v114
    %v1378 = vunpack.c.l.b16 %v115
    %v1379 = vunpack.c.h.b16 %v115
    %v1380 = vunpack.c.l.b16 %v116
    %v1381 = vunpack.c.h.b16 %v116
    %v1382 = vunpack.c.l.b16 %v117
    %v1383 = vunpack.c.h.b16 %v117
    %v1384 = vunpack.c.l.b16 %v118
    %v1385 = vunpack.c.h.b16 %v118
    %v1386 = vunpack.c.l.b16 %v119
    %v1387 = vunpack.c.h.b16 %v119
    %v1388 = vunpack.c.l.b16 %v120
    %v1389 = vunpack.c.h.b16 %v120
    %v1390 = vunpack.c.l.b16 %v121
    %v1391 = vunpack.c.h.b16 %v121
    %v1392 = vunpack.c.l.b16 %v122
    %v1393 = vunpack.c.h.b16 %v122
    %v1394 = vunpack.c.l.b16 %v123
    %v1395 = vunpack.c.h.b16 %v123
    %v1396 = vunpack.c.l.b16 %v124
    %v1397 = vunpack.c.h.b16 %v124
    %v1398 = vunpack.c.l.b16 %v125
    %v1399 = vunpack.c.h.b16 %v125
    %v1400 = vunpack.c.l.b16 %v126
    %v1401 = vunpack.c.h.b16 %v126
    %v1402 = vunpack.c.l.b16 %v127
    %v1403 = vunpack.c.h.b16 %v127
    %v1404 = vunpack.c.l.b16 %v128
    %v1405 = vunpack.c.h.b16 %v128
    %v1406 = vunpack.c.l.b16 %v129
    %v1407 = vunpack.c.h.b16 %v129
    %v1408 = vunpack.c.l.b16 %v130
    %v1409 = vunpack.c.h.b16 %v130
    %v1410 = vunpack.c.l.b16 %v131
    %v1411 = vunpack.c.h.b16 %v131
    %v1412 = vunpack.c.l.b16 %v132
    %v1413 = vunpack.c.h.b16 %v132
    %v1414 = vunpack.c.l.b16 %v133
    %v1415 = vunpack.c.h.b16 %v133
    %v1416 = vunpack.c.l.b16 %v134
    %v1417 = vunpack.c.h.b16 %v134
    %v1418 = vunpack.c.l.b16 %v135
    %v1419 = vunpack.c.h.b16 %v135
    %v1420 = vunpack.c.l.b16 %v136
    %v1421 = vunpack.c.h.b16 %v136
    %v1422 = vunpack.c.l.b16 %v137
    %v1423 = vunpack.c.h.b16 %v137
    %v1424 = vunpack.c.l.b16 %v138
    %v1425 = vunpack.c.h.b16 %v138
    %v1426 = vunpack.c.l.b16 %v139
    %v1427 = vunpack.c.h.b16 %v139
    %v1428 = vunpack.c.l.b16 %v140
    %v1429 = vunpack.c.h.b16 %v140
    %v1430 = vunpack.c.l.b16 %v141
    %v1431 = vunpack.c.h.b16 %v141
    %v1432 = vunpack.c.l.b16 %v142
    %v1433 = vunpack.c.h.b16 %v142
    %v1434 = vunpack.c.l.b16 %v143
    %v1435 = vunpack.c.h.b16 %v143
    %v1436 = vunpack.c.l.b16 %v144
    %v1437 = vunpack.c.h.b16 %v144
    %v1438 = vunpack.c.l.b16 %v145
    %v1439 = vunpack.c.h.b16 %v145
    %v1440 = vunpack.c.l.b16 %v146
    %v1441 = vunpack.c.h.b16 %v146
    %v1442 = vunpack.c.l.b16 %v147
    %v1443 = vunpack.c.h.b16 %v147
    %v1444 = vunpack.c.l.b16 %v148
    %v1445 = vunpack.c.h.b16 %v148
    %v1446 = vunpack.c.l.b16 %v149
    %v1447 = vunpack.c.h.b16 %v149
    %v1448 = vunpack.c.l.b16 %v150
    %v1449 = vunpack.c.h.b16 %v150
    %v1450 = vunpack.c.l.b16 %v151
    %v1451 = vunpack.c.h.b16 %v151
    %v1452 = vunpack.c.l.b16 %v152
    %v1453 = vunpack.c.h.b16 %v152
    %v1454 = vunpack.c.l.b16 %v153
    %v1455 = vunpack.c.h.b16 %v153
    %v1456 = vunpack.c.l.b16 %v154
    %v1457 = vunpack.c.h.b16 %v154
    %v1458 = vunpack.c.l.b16 %v155
    %v1459 = vunpack.c.h.b16 %v155
    %v1460 = vunpack.c.l.b16 %v156
    %v1461 = vunpack.c.h.b16 %v156
    %v1462 = vunpack.c.l.b16 %v157
    %v1463 = vunpack.c.h.b16 %v157
    %v1464 = vunpack.c.l.b16 %v158
    %v1465 = vunpack.c.h.b16 %v158
    %v1466 = vunpack.c.l.b16 %v159
    %v1467 = vunpack.c.h.b16 %v159
    %v1468 = vunpack.c.l.b16 %v160
    %v1469 = vunpack.c.h.b16 %v160
    %v1470 = vunpack.c.l.b16 %v161
    %v1471 = vunpack.c.h.b16 %v161
    %v1472 = vunpack.c.l.b16 %v162
    %v1473 = vunpack.c.h.b16 %v162
    %v1474 = vunpack.c.l.b16 %v163
    %v1475 = vunpack.c.h.b16 %v163
    %v1476 = vunpack.c.l.b16 %v164
    %v1477 = vunpack.c.h.b16 %v164
    %v1478 = vunpack.c.l.b16 %v165
    %v1479 = vunpack.c.h.b16 %v165
    %v1480 = vunpack.c.l.b16 %v166
    %v1481 = vunpack.c.h.b16 %v166
    %v1482 = vunpack.c.l.b16 %v167
    %v1483 = vunpack.c.h.b16 %v167
    %v1484 = vunpack.c.l.b16 %v168
    %v1485 = vunpack.c.h.b16 %v168
    %v1486 = vunpack.c.l.b16 %v169
    %v1487 = vunpack.c.h.b16 %v169
    %v1488 = vunpack.c.l.b16 %v170
    %v1489 = vunpack.c.h.b16 %v170
    %v1490 = vunpack.c.l.b16 %v171
    %v1491 = vunpack.c.h.b16 %v171
    %v1492 = vunpack.c.l.b16 %v172
    %v1493 = vunpack.c.h.b16 %v172
    %v1494 = vunpack.c.l.b16 %v173
    %v1495 = vunpack.c.h.b16 %v173
    %v1496 = vunpack.c.l.b16 %v174
    %v1497 = vunpack.c.h.b16 %v174
    %v1498 = vunpack.c.l.b16 %v175
    %v1499 = vunpack.c.h.b16 %v175
    %v1500 = vunpack.c.l.b16 %v176
    %v1501 = vunpack.c.h.b16 %v176
    %v1502 = vunpack.c.l.b16 %v177
    %v1503 = vunpack.c.h.b16 %v177
    %v1504 = vunpack.c.l.b16 %v178
    %v1505 = vunpack.c.h.b16 %v178
    %v1506 = vunpack.c.l.b16 %v179
    %v1507 = vunpack.c.h.b16 %v179
    %v1508 = vunpack.c.l.b16 %v180
    %v1509 = vunpack.c.h.b16 %v180
    %v1510 = vunpack.c.l.b16 %v181
    %v1511 = vunpack.c.h.b16 %v181
    %v1512 = vunpack.c.l.b16 %v182
    %v1513 = vunpack.c.h.b16 %v182
    %v1514 = vunpack.c.l.b16 %v183
    %v1515 = vunpack.c.h.b16 %v183
    %v1516 = vunpack.c.l.b16 %v184
    %v1517 = vunpack.c.h.b16 %v184
    %v1518 = vunpack.c.l.b16 %v185
    %v1519 = vunpack.c.h.b16 %v185
    %v1520 = vunpack.c.l.b16 %v186
    %v1521 = vunpack.c.h.b16 %v186
    %v1522 = vunpack.c.l.b16 %v187
    %v1523 = vunpack.c.h.b16 %v187
    %v1524 = vunpack.c.l.b16 %v188
    %v1525 = vunpack.c.h.b16 %v188
    %v1526 = vunpack.c.l.b16 %v189
    %v1527 = vunpack.c.h.b16 %v189
    %v1528 = vunpack.c.l.b16 %v190
    %v1529 = vunpack.c.h.b16 %v190
    %v1530 = vunpack.c.l.b16 %v191
    %v1531 = vunpack.c.h.b16 %v191
    %v1532 = vunpack.c.l.b16 %v192
    %v1533 = vunpack.c.h.b16 %v192
    %v1534 = vunpack.c.l.b16 %v193
    %v1535 = vunpack.c.h.b16 %v193
    %v1536 = vunpack.c.l.b16 %v194
    %v1537 = vunpack.c.h.b16 %v194
    %v1538 = vunpack.c.l.b16 %v195
    %v1539 = vunpack.c.h.b16 %v195
    %v1540 = vunpack.c.l.b16 %v196
    %v1541 = vunpack.c.h.b16 %v196
    %v1542 = vunpack.c.l.b16 %v197
    %v1543 = vunpack.c.h.b16 %v197
    %v1544 = vunpack.c.l.b16 %v198
    %v1545 = vunpack.c.h.b16 %v198
    %v1546 = vunpack.c.l.b16 %v199
    %v1547 = vunpack.c.h.b16 %v199
    %v1548 = vunpack.c.l.b16 %v200
    %v1549 = vunpack.c.h.b16 %v200
    %v1550 = vunpack.c.l.b16 %v201
    %v1551 = vunpack.c.h.b16 %v201
    %v1552 = vunpack.c.l.b16 %v202
    %v1553 = vunpack.c.h.b16 %v202
    %v1554 = vunpack.c.l.b16 %v203
    %v1555 = vunpack.c.h.b16 %v203
    %v1556 = vunpack.c.l.b16 %v204
    %v1557 = vunpack.c.h.b16 %v204
    %v1558 = vunpack.c.l.b16 %v205
    %v1559 = vunpack.c.h.b16 %v205
    %v1560 = vunpack.c.l.b16 %v206
    %v1561 = vunpack.c.h.b16 %v206
    %v1562 = vunpack.c.l.b16 %v207
    %v1563 = vunpack.c.h.b16 %v207
    %v1564 = vunpack.c.l.b16 %v208
    %v1565 = vunpack.c.h.b16 %v208
    %v1566 = vunpack.c.l.b16 %v209
    %v1567 = vunpack.c.h.b16 %v209
    %v1568 = vunpack.c.l.b16 %v210
    %v1569 = vunpack.c.h.b16 %v210
    %v1570 = vunpack.c.l.b16 %v211
    %v1571 = vunpack.c.h.b16 %v211
    %v1572 = vunpack.c.l.b16 %v212
    %v1573 = vunpack.c.h.b16 %v212
    %v1574 = vunpack.c.l.b16 %v213
    %v1575 = vunpack.c.h.b16 %v213
    %v1576 = vunpack.c.l.b16 %v214
    %v1577 = vunpack.c.h.b16 %v214
    %v1578 = vunpack.c.l.b16 %v215
    %v1579 = vunpack.c.h.b16 %v215
    %v1580 = vpack.c.b16 %v1332, %v1324
    %v1581 = vpack.c.b16 %v1333, %v1325
    %v1582 = vpack.c.b16 %v1334, %v1326
    %v1583 = vpack.c.b16 %v1335, %v1327
    %v1584 = vpack.c.b16 %v1336, %v1328
    %v1585 = vpack.c.b16 %v1337, %v1329
    %v1586 = vpack.c.b16 %v1338, %v1330
    %v1587 = vpack.c.b16 %v1339, %v1331
    %v1588 = vpack.c.b16 %v1348, %v1340
    %v1589 = vpack.c.b16 %v1349, %v1341
    %v1590 = vpack.c.b16 %v1350, %v1342
    %v1591 = vpack.c.b16 %v1351, %v1343
    %v1592 = vpack.c.b16 %v1352, %v1344
    %v1593 = vpack.c.b16 %v1353, %v1345
    %v1594 = vpack.c.b16 %v1354, %v1346
    %v1595 = vpack.c.b16 %v1355, %v1347
    %v1596 = vpack.c.b16 %v1364, %v1356
    %v1597 = vpack.c.b16 %v1365, %v1357
    %v1598 = vpack.c.b16 %v1366, %v1358
    %v1599 = vpack.c.b16 %v1367, %v1359
    %v1600 = vpack.c.b16 %v1368, %v1360
    %v1601 = vpack.c.b16 %v1369, %v1361
    %v1602 = vpack.c.b16 %v1370, %v1362
    %v1603 = vpack.c.b16 %v1371, %v1363
    %v1604 = vpack.c.b16 %v1380, %v1372
    %v1605 = vpack.c.b16 %v1381, %v1373
    %v1606 = vpack.c.b16 %v1382, %v1374
    %v1607 = vpack.c.b16 %v1383, %v1375
    %v1608 = vpack.c.b16 %v1384, %v1376
    %v1609 = vpack.c.b16 %v1385, %v1377
    %v1610 = vpack.c.b16 %v1386, %v1378
    %v1611 = vpack.c.b16 %v1387, %v1379
    %v1612 = vpack.c.b16 %v1396, %v1388
    %v1613 = vpack.c.b16 %v1397, %v1389
    %v1614 = vpack.c.b16 %v1398, %v1390
    %v1615 = vpack.c.b16 %v1399, %v1391
    %v1616 = vpack.c.b16 %v1400, %v1392
    %v1617 = vpack.c.b16 %v1401, %v1393
    %v1618 = vpack.c.b16 %v1402, %v1394
    %v1619 = vpack.c.b16 %v1403, %v1395
    %v1620 = vpack.c.b16 %v1412, %v1404
    %v1621 = vpack.c.b16 %v1413, %v1405
    %v1622 = vpack.c.b16 %v1414, %v1406
    %v1623 = vpack.c.b16 %v1415, %v1407
    %v1624 = vpack.c.b16 %v1416, %v1408
    %v1625 = vpack.c.b16 %v1417, %v1409
    %v1626 = vpack.c.b16 %v1418, %v1410
    %v1627 = vpack.c.b16 %v1419, %v1411
    %v1628 = vpack.c.b16 %v1428, %v1420
    %v1629 = vpack.c.b16 %v1429, %v1421
    %v1630 = vpack.c.b16 %v1430, %v1422
    %v1631 = vpack.c.b16 %v1431, %v1423
    %v1632 = vpack.c.b16 %v1432, %v1424
    %v1633 = vpack.c.b16 %v1433, %v1425
    %v1634 = vpack.c.b16 %v1434, %v1426
    %v1635 = vpack.c.b16 %v1435, %v1427
    %v1636 = vpack.c.b16 %v1444, %v1436
    %v1637 = vpack.c.b16 %v1445, %v1437
    %v1638 = vpack.c.b16 %v1446, %v1438
    %v1639 = vpack.c.b16 %v1447, %v1439
    %v1640 = vpack.c.b16 %v1448, %v1440
    %v1641 = vpack.c.b16 %v1449, %v1441
    %v1642 = vpack.c.b16 %v1450, %v1442
    %v1643 = vpack.c.b16 %v1451, %v1443
    %v1644 = vpack.c.b16 %v1460, %v1452
    %v1645 = vpack.c.b16 %v1461, %v1453
    %v1646 = vpack.c.b16 %v1462, %v1454
    %v1647 = vpack.c.b16 %v1463, %v1455
    %v1648 = vpack.c.b16 %v1464, %v1456
    %v1649 = vpack.c.b16 %v1465, %v1457
    %v1650 = vpack.c.b16 %v1466, %v1458
    %v1651 = vpack.c.b16 %v1467, %v1459
    %v1652 = vpack.c.b16 %v1476, %v1468
    %v1653 = vpack.c.b16 %v1477, %v1469
    %v1654 = vpack.c.b16 %v1478, %v1470
    %v1655 = vpack.c.b16 %v1479, %v1471
    %v1656 = vpack.c.b16 %v1480, %v1472
    %v1657 = vpack.c.b16 %v1481, %v1473
    %v1658 = vpack.c.b16 %v1482, %v1474
    %v1659 = vpack.c.b16 %v1483, %v1475
    %v1660 = vpack.c.b16 %v1492, %v1484
    %v1661 = vpack.c.b16 %v1493, %v1485
    %v1662 = vpack.c.b16 %v1494, %v1486
    %v1663 = vpack.c.b16 %v1495, %v1487
    %v1664 = vpack.c.b16 %v1496, %v1488
    %v1665 = vpack.c.b16 %v1497, %v1489
    %v1666 = vpack.c.b16 %v1498, %v1490
    %v1667 = vpack.c.b16 %v1499, %v1491
    %v1668 = vpack.c.b16 %v1508, %v1500
    %v1669 = vpack.c.b16 %v1509, %v1501
    %v1670 = vpack.c.b16 %v1510, %v1502
    %v1671 = vpack.c.b16 %v1511, %v1503
    %v1672 = vpack.c.b16 %v1512, %v1504
    %v1673 = vpack.c.b16 %v1513, %v1505
    %v1674 = vpack.c.b16 %v1514, %v1506
    %v1675 = vpack.c.b16 %v1515, %v1507
    %v1676 = vpack.c.b16 %v1524, %v1516
    %v1677 = vpack.c.b16 %v1525, %v1517
    %v1678 = vpack.c.b16 %v1526, %v1518
    %v1679 = vpack.c.b16 %v1527, %v1519
    %v1680 = vpack.c.b16 %v1528, %v1520
    %v1681 = vpack.c.b16 %v1529, %v1521
    %v1682 = vpack.c.b16 %v1530, %v1522
    %v1683 = vpack.c.b16 %v1531, %v1523
    %v1684 = vpack.c.b16 %v1540, %v1532
    %v1685 = vpack.c.b16 %v1541, %v1533
    %v1686 = vpack.c.b16 %v1542, %v1534
    %v1687 = vpack.c.b16 %v1543, %v1535
    %v1688 = vpack.c.b16 %v1544, %v1536
    %v1689 = vpack.c.b16 %v1545, %v1537
    %v1690 = vpack.c.b16 %v1546, %v1538
    %v1691 = vpack.c.b16 %v1547, %v1539
    %v1692 = vpack.c.b16 %v1556, %v1548
    %v1693 = vpack.c.b16 %v1557, %v1549
    %v1694 = vpack.c.b16 %v1558, %v1550
    %v1695 = vpack.c.b16 %v1559, %v1551
    %v1696 = vpack.c.b16 %v1560, %v1552
    %v1697 = vpack.c.b16 %v1561, %v1553
    %v1698 = vpack.c.b16 %v1562, %v1554
    %v1699 = vpack.c.b16 %v1563, %v1555
    %v1700 = vpack.c.b16 %v1572, %v1564
    %v1701 = vpack.c.b16 %v1573, %v1565
    %v1702 = vpack.c.b16 %v1574, %v1566
    %v1703 = vpack.c.b16 %v1575, %v1567
    %v1704 = vpack.c.b16 %v1576, %v1568
    %v1705 = vpack.c.b16 %v1577, %v1569
    %v1706 = vpack.c.b16 %v1578, %v1570
    %v1707 = vpack.c.b16 %v1579, %v1571
    %1836 = vmatprep.subr.bf16.mxu0 %v1581
    %1837 = vmatpush1.bf16.msra.mxu0 %v1580
    %1838 = vmatprep.subr.bf16.mxu0 %v1589
    %1839 = vmatpush1.bf16.msra.mxu0 %v1588
    %1840 = vmatprep.subr.bf16.mxu0 %v1597
    %1841 = vmatpush1.bf16.msra.mxu0 %v1596
    %1842 = vmatprep.subr.bf16.mxu0 %v1605
    %1843 = vmatpush1.bf16.msra.mxu0 %v1604
    %1844 = vmatprep.subr.bf16.mxu0 %v1613
    %1845 = vmatpush1.bf16.msra.mxu0 %v1612
    %1846 = vmatprep.subr.bf16.mxu0 %v1621
    %1847 = vmatpush1.bf16.msra.mxu0 %v1620
    %1848 = vmatprep.subr.bf16.mxu0 %v1629
    %1849 = vmatpush1.bf16.msra.mxu0 %v1628
    %1850 = vmatprep.subr.bf16.mxu0 %v1637
    %1851 = vmatpush1.bf16.msra.mxu0 %v1636
    %1852 = vmatprep.subr.bf16.mxu0 %v1645
    %1853 = vmatpush1.bf16.msra.mxu0 %v1644
    %1854 = vmatprep.subr.bf16.mxu0 %v1653
    %1855 = vmatpush1.bf16.msra.mxu0 %v1652
    %1856 = vmatprep.subr.bf16.mxu0 %v1661
    %1857 = vmatpush1.bf16.msra.mxu0 %v1660
    %1858 = vmatprep.subr.bf16.mxu0 %v1669
    %1859 = vmatpush1.bf16.msra.mxu0 %v1668
    %1860 = vmatprep.subr.bf16.mxu0 %v1677
    %1861 = vmatpush1.bf16.msra.mxu0 %v1676
    %1862 = vmatprep.subr.bf16.mxu0 %v1685
    %1863 = vmatpush1.bf16.msra.mxu0 %v1684
    %1864 = vmatprep.subr.bf16.mxu0 %v1693
    %1865 = vmatpush1.bf16.msra.mxu0 %v1692
    %1866 = vmatprep.subr.bf16.mxu0 %v1701
    %1867 = vmatpush1.bf16.msra.mxu0 %v1700
    %1868 = vmatprep.mubr.bf16.mxu0 %v65
    %1869 = vmatmul.mubr.bf16.gmra.mrb[0].mxu0 %v64
    %v1870 = vpop.f32.mrb[0].mxu0
    %v1871 = vadd.f32 %v1019, %v1870
    %v1872 = vpop.f32.mrb[0].mxu0
    %v1873 = vadd.f32 %v1021, %v1872
    %v1874 = vpop.f32.mrb[0].mxu0
    %v1875 = vadd.f32 %v1023, %v1874
    %v1876 = vpop.f32.mrb[0].mxu0
    %v1877 = vadd.f32 %v1025, %v1876
    %1878 = vmatprep.mubr.bf16.mxu0 %v67
    %1879 = vmatmul.mubr.bf16.gmra.mrb[0].mxu0 %v66
    %v1880 = vpop.f32.mrb[0].mxu0
    %v1881 = vadd.f32 %v1029, %v1880
    %v1882 = vpop.f32.mrb[0].mxu0
    %v1883 = vadd.f32 %v1031, %v1882
    %v1884 = vpop.f32.mrb[0].mxu0
    %v1885 = vadd.f32 %v1033, %v1884
    %v1886 = vpop.f32.mrb[0].mxu0
    %v1887 = vadd.f32 %v1035, %v1886
    %1888 = vdwg.mxu0
    %1889 = vmatprep.subr.bf16.mxu0 %v1583
    %1890 = vmatpush1.bf16.msra.mxu0 %v1582
    %1891 = vmatprep.subr.bf16.mxu0 %v1591
    %1892 = vmatpush1.bf16.msra.mxu0 %v1590
    %1893 = vmatprep.subr.bf16.mxu0 %v1599
    %1894 = vmatpush1.bf16.msra.mxu0 %v1598
    %1895 = vmatprep.subr.bf16.mxu0 %v1607
    %1896 = vmatpush1.bf16.msra.mxu0 %v1606
    %1897 = vmatprep.subr.bf16.mxu0 %v1615
    %1898 = vmatpush1.bf16.msra.mxu0 %v1614
    %1899 = vmatprep.subr.bf16.mxu0 %v1623
    %1900 = vmatpush1.bf16.msra.mxu0 %v1622
    %1901 = vmatprep.subr.bf16.mxu0 %v1631
    %1902 = vmatpush1.bf16.msra.mxu0 %v1630
    %1903 = vmatprep.subr.bf16.mxu0 %v1639
    %1904 = vmatpush1.bf16.msra.mxu0 %v1638
    %1905 = vmatprep.subr.bf16.mxu0 %v1647
    %1906 = vmatpush1.bf16.msra.mxu0 %v1646
    %1907 = vmatprep.subr.bf16.mxu0 %v1655
    %1908 = vmatpush1.bf16.msra.mxu0 %v1654
    %1909 = vmatprep.subr.bf16.mxu0 %v1663
    %1910 = vmatpush1.bf16.msra.mxu0 %v1662
    %1911 = vmatprep.subr.bf16.mxu0 %v1671
    %1912 = vmatpush1.bf16.msra.mxu0 %v1670
    %1913 = vmatprep.subr.bf16.mxu0 %v1679
    %1914 = vmatpush1.bf16.msra.mxu0 %v1678
    %1915 = vmatprep.subr.bf16.mxu0 %v1687
    %1916 = vmatpush1.bf16.msra.mxu0 %v1686
    %1917 = vmatprep.subr.bf16.mxu0 %v1695
    %1918 = vmatpush1.bf16.msra.mxu0 %v1694
    %1919 = vmatprep.subr.bf16.mxu0 %v1703
    %1920 = vmatpush1.bf16.msra.mxu0 %v1702
    %1921 = vmatprep.mubr.bf16.mxu0 %v65
    %1922 = vmatmul.mubr.bf16.gmra.mrb[0].mxu0 %v64
    %v1923 = vpop.f32.mrb[0].mxu0
    %v1924 = vadd.f32 %v1072, %v1923
    %v1925 = vpop.f32.mrb[0].mxu0
    %v1926 = vadd.f32 %v1074, %v1925
    %v1927 = vpop.f32.mrb[0].mxu0
    %v1928 = vadd.f32 %v1076, %v1927
    %v1929 = vpop.f32.mrb[0].mxu0
    %v1930 = vadd.f32 %v1078, %v1929
    %1931 = vmatprep.mubr.bf16.mxu0 %v67
    %1932 = vmatmul.mubr.bf16.gmra.mrb[0].mxu0 %v66
    %v1933 = vpop.f32.mrb[0].mxu0
    %v1934 = vadd.f32 %v1082, %v1933
    %v1935 = vpop.f32.mrb[0].mxu0
    %v1936 = vadd.f32 %v1084, %v1935
    %v1937 = vpop.f32.mrb[0].mxu0
    %v1938 = vadd.f32 %v1086, %v1937
    %v1939 = vpop.f32.mrb[0].mxu0
    %v1940 = vadd.f32 %v1088, %v1939
    %1941 = vdwg.mxu0
    %1942 = vmatprep.subr.bf16.mxu0 %v1585
    %1943 = vmatpush1.bf16.msra.mxu0 %v1584
    %1944 = vmatprep.subr.bf16.mxu0 %v1593
    %1945 = vmatpush1.bf16.msra.mxu0 %v1592
    %1946 = vmatprep.subr.bf16.mxu0 %v1601
    %1947 = vmatpush1.bf16.msra.mxu0 %v1600
    %1948 = vmatprep.subr.bf16.mxu0 %v1609
    %1949 = vmatpush1.bf16.msra.mxu0 %v1608
    %1950 = vmatprep.subr.bf16.mxu0 %v1617
    %1951 = vmatpush1.bf16.msra.mxu0 %v1616
    %1952 = vmatprep.subr.bf16.mxu0 %v1625
    %1953 = vmatpush1.bf16.msra.mxu0 %v1624
    %1954 = vmatprep.subr.bf16.mxu0 %v1633
    %1955 = vmatpush1.bf16.msra.mxu0 %v1632
    %1956 = vmatprep.subr.bf16.mxu0 %v1641
    %1957 = vmatpush1.bf16.msra.mxu0 %v1640
    %1958 = vmatprep.subr.bf16.mxu0 %v1649
    %1959 = vmatpush1.bf16.msra.mxu0 %v1648
    %1960 = vmatprep.subr.bf16.mxu0 %v1657
    %1961 = vmatpush1.bf16.msra.mxu0 %v1656
    %1962 = vmatprep.subr.bf16.mxu0 %v1665
    %1963 = vmatpush1.bf16.msra.mxu0 %v1664
    %1964 = vmatprep.subr.bf16.mxu0 %v1673
    %1965 = vmatpush1.bf16.msra.mxu0 %v1672
    %1966 = vmatprep.subr.bf16.mxu0 %v1681
    %1967 = vmatpush1.bf16.msra.mxu0 %v1680
    %1968 = vmatprep.subr.bf16.mxu0 %v1689
    %1969 = vmatpush1.bf16.msra.mxu0 %v1688
    %1970 = vmatprep.subr.bf16.mxu0 %v1697
    %1971 = vmatpush1.bf16.msra.mxu0 %v1696
    %1972 = vmatprep.subr.bf16.mxu0 %v1705
    %1973 = vmatpush1.bf16.msra.mxu0 %v1704
    %1974 = vmatprep.mubr.bf16.mxu0 %v65
    %1975 = vmatmul.mubr.bf16.gmra.mrb[0].mxu0 %v64
    %v1976 = vpop.f32.mrb[0].mxu0
    %v1977 = vadd.f32 %v1125, %v1976
    %v1978 = vpop.f32.mrb[0].mxu0
    %v1979 = vadd.f32 %v1127, %v1978
    %v1980 = vpop.f32.mrb[0].mxu0
    %v1981 = vadd.f32 %v1129, %v1980
    %v1982 = vpop.f32.mrb[0].mxu0
    %v1983 = vadd.f32 %v1131, %v1982
    %1984 = vmatprep.mubr.bf16.mxu0 %v67
    %1985 = vmatmul.mubr.bf16.gmra.mrb[0].mxu0 %v66
    %v1986 = vpop.f32.mrb[0].mxu0
    %v1987 = vadd.f32 %v1135, %v1986
    %v1988 = vpop.f32.mrb[0].mxu0
    %v1989 = vadd.f32 %v1137, %v1988
    %v1990 = vpop.f32.mrb[0].mxu0
    %v1991 = vadd.f32 %v1139, %v1990
    %v1992 = vpop.f32.mrb[0].mxu0
    %v1993 = vadd.f32 %v1141, %v1992
    %1994 = vdwg.mxu0
    %1995 = vmatprep.subr.bf16.mxu0 %v1587
    %1996 = vmatpush1.bf16.msra.mxu0 %v1586
    %1997 = vmatprep.subr.bf16.mxu0 %v1595
    %1998 = vmatpush1.bf16.msra.mxu0 %v1594
    %1999 = vmatprep.subr.bf16.mxu0 %v1603
    %2000 = vmatpush1.bf16.msra.mxu0 %v1602
    %2001 = vmatprep.subr.bf16.mxu0 %v1611
    %2002 = vmatpush1.bf16.msra.mxu0 %v1610
    %2003 = vmatprep.subr.bf16.mxu0 %v1619
    %2004 = vmatpush1.bf16.msra.mxu0 %v1618
    %2005 = vmatprep.subr.bf16.mxu0 %v1627
    %2006 = vmatpush1.bf16.msra.mxu0 %v1626
    %2007 = vmatprep.subr.bf16.mxu0 %v1635
    %2008 = vmatpush1.bf16.msra.mxu0 %v1634
    %2009 = vmatprep.subr.bf16.mxu0 %v1643
    %2010 = vmatpush1.bf16.msra.mxu0 %v1642
    %2011 = vmatprep.subr.bf16.mxu0 %v1651
    %2012 = vmatpush1.bf16.msra.mxu0 %v1650
    %2013 = vmatprep.subr.bf16.mxu0 %v1659
    %2014 = vmatpush1.bf16.msra.mxu0 %v1658
    %2015 = vmatprep.subr.bf16.mxu0 %v1667
    %2016 = vmatpush1.bf16.msra.mxu0 %v1666
    %2017 = vmatprep.subr.bf16.mxu0 %v1675
    %2018 = vmatpush1.bf16.msra.mxu0 %v1674
    %2019 = vmatprep.subr.bf16.mxu0 %v1683
    %2020 = vmatpush1.bf16.msra.mxu0 %v1682
    %2021 = vmatprep.subr.bf16.mxu0 %v1691
    %2022 = vmatpush1.bf16.msra.mxu0 %v1690
    %2023 = vmatprep.subr.bf16.mxu0 %v1699
    %2024 = vmatpush1.bf16.msra.mxu0 %v1698
    %2025 = vmatprep.subr.bf16.mxu0 %v1707
    %2026 = vmatpush1.bf16.msra.mxu0 %v1706
    %2027 = vmatprep.mubr.bf16.mxu0 %v65
    %2028 = vmatmul.mubr.bf16.gmra.mrb[0].mxu0 %v64
    %v2029 = vpop.f32.mrb[0].mxu0
    %v2030 = vadd.f32 %v1178, %v2029
    %v2031 = vpop.f32.mrb[0].mxu0
    %v2032 = vadd.f32 %v1180, %v2031
    %v2033 = vpop.f32.mrb[0].mxu0
    %v2034 = vadd.f32 %v1182, %v2033
    %v2035 = vpop.f32.mrb[0].mxu0
    %v2036 = vadd.f32 %v1184, %v2035
    %2037 = vmatprep.mubr.bf16.mxu0 %v67
    %2038 = vmatmul.mubr.bf16.gmra.mrb[0].mxu0 %v66
    %v2039 = vpop.f32.mrb[0].mxu0
    %v2040 = vadd.f32 %v1188, %v2039
    %v2041 = vpop.f32.mrb[0].mxu0
    %v2042 = vadd.f32 %v1190, %v2041
    %v2043 = vpop.f32.mrb[0].mxu0
    %v2044 = vadd.f32 %v1192, %v2043
    %v2045 = vpop.f32.mrb[0].mxu0
    %v2046 = vadd.f32 %v1194, %v2045
    %2047 = vdwg.mxu0
    %2048 = vmatprep.subr.bf16.mxu0 %v1581
    %2049 = vmatpush1.bf16.msra.mxu0 %v1580
    %2050 = vmatprep.subr.bf16.mxu0 %v1589
    %2051 = vmatpush1.bf16.msra.mxu0 %v1588
    %2052 = vmatprep.subr.bf16.mxu0 %v1597
    %2053 = vmatpush1.bf16.msra.mxu0 %v1596
    %2054 = vmatprep.subr.bf16.mxu0 %v1605
    %2055 = vmatpush1.bf16.msra.mxu0 %v1604
    %2056 = vmatprep.subr.bf16.mxu0 %v1613
    %2057 = vmatpush1.bf16.msra.mxu0 %v1612
    %2058 = vmatprep.subr.bf16.mxu0 %v1621
    %2059 = vmatpush1.bf16.msra.mxu0 %v1620
    %2060 = vmatprep.subr.bf16.mxu0 %v1629
    %2061 = vmatpush1.bf16.msra.mxu0 %v1628
    %2062 = vmatprep.subr.bf16.mxu0 %v1637
    %2063 = vmatpush1.bf16.msra.mxu0 %v1636
    %2064 = vmatprep.subr.bf16.mxu0 %v1645
    %2065 = vmatpush1.bf16.msra.mxu0 %v1644
    %2066 = vmatprep.subr.bf16.mxu0 %v1653
    %2067 = vmatpush1.bf16.msra.mxu0 %v1652
    %2068 = vmatprep.subr.bf16.mxu0 %v1661
    %2069 = vmatpush1.bf16.msra.mxu0 %v1660
    %2070 = vmatprep.subr.bf16.mxu0 %v1669
    %2071 = vmatpush1.bf16.msra.mxu0 %v1668
    %2072 = vmatprep.subr.bf16.mxu0 %v1677
    %2073 = vmatpush1.bf16.msra.mxu0 %v1676
    %2074 = vmatprep.subr.bf16.mxu0 %v1685
    %2075 = vmatpush1.bf16.msra.mxu0 %v1684
    %2076 = vmatprep.subr.bf16.mxu0 %v1693
    %2077 = vmatpush1.bf16.msra.mxu0 %v1692
    %2078 = vmatprep.subr.bf16.mxu0 %v1701
    %2079 = vmatpush1.bf16.msra.mxu0 %v1700
    %2080 = vmatprep.mubr.bf16.mxu0 %v85
    %2081 = vmatmul.mubr.bf16.gmra.mrb[0].mxu0 %v84
    %v2082 = vpop.f32.mrb[0].mxu0
    %v2083 = vadd.f32 0.0, %v2082
    %v2084 = vpop.f32.mrb[0].mxu0
    %v2085 = vadd.f32 0.0, %v2084
    %v2086 = vpop.f32.mrb[0].mxu0
    %v2087 = vadd.f32 0.0, %v2086
    %v2088 = vpop.f32.mrb[0].mxu0
    %v2089 = vadd.f32 0.0, %v2088
    %2090 = vmatprep.mubr.bf16.mxu0 %v87
    %2091 = vmatmul.mubr.bf16.gmra.mrb[0].mxu0 %v86
    %v2092 = vpop.f32.mrb[0].mxu0
    %v2093 = vadd.f32 0.0, %v2092
    %v2094 = vpop.f32.mrb[0].mxu0
    %v2095 = vadd.f32 0.0, %v2094
    %v2096 = vpop.f32.mrb[0].mxu0
    %v2097 = vadd.f32 0.0, %v2096
    %v2098 = vpop.f32.mrb[0].mxu0
    %v2099 = vadd.f32 0.0, %v2098
    %2100 = vdwg.mxu0
    %2101 = vmatprep.subr.bf16.mxu0 %v1583
    %2102 = vmatpush1.bf16.msra.mxu0 %v1582
    %2103 = vmatprep.subr.bf16.mxu0 %v1591
    %2104 = vmatpush1.bf16.msra.mxu0 %v1590
    %2105 = vmatprep.subr.bf16.mxu0 %v1599
    %2106 = vmatpush1.bf16.msra.mxu0 %v1598
    %2107 = vmatprep.subr.bf16.mxu0 %v1607
    %2108 = vmatpush1.bf16.msra.mxu0 %v1606
    %2109 = vmatprep.subr.bf16.mxu0 %v1615
    %2110 = vmatpush1.bf16.msra.mxu0 %v1614
    %2111 = vmatprep.subr.bf16.mxu0 %v1623
    %2112 = vmatpush1.bf16.msra.mxu0 %v1622
    %2113 = vmatprep.subr.bf16.mxu0 %v1631
    %2114 = vmatpush1.bf16.msra.mxu0 %v1630
    %2115 = vmatprep.subr.bf16.mxu0 %v1639
    %2116 = vmatpush1.bf16.msra.mxu0 %v1638
    %2117 = vmatprep.subr.bf16.mxu0 %v1647
    %2118 = vmatpush1.bf16.msra.mxu0 %v1646
    %2119 = vmatprep.subr.bf16.mxu0 %v1655
    %2120 = vmatpush1.bf16.msra.mxu0 %v1654
    %2121 = vmatprep.subr.bf16.mxu0 %v1663
    %2122 = vmatpush1.bf16.msra.mxu0 %v1662
    %2123 = vmatprep.subr.bf16.mxu0 %v1671
    %2124 = vmatpush1.bf16.msra.mxu0 %v1670
    %2125 = vmatprep.subr.bf16.mxu0 %v1679
    %2126 = vmatpush1.bf16.msra.mxu0 %v1678
    %2127 = vmatprep.subr.bf16.mxu0 %v1687
    %2128 = vmatpush1.bf16.msra.mxu0 %v1686
    %2129 = vmatprep.subr.bf16.mxu0 %v1695
    %2130 = vmatpush1.bf16.msra.mxu0 %v1694
    %2131 = vmatprep.subr.bf16.mxu0 %v1703
    %2132 = vmatpush1.bf16.msra.mxu0 %v1702
    %2133 = vmatprep.mubr.bf16.mxu0 %v85
    %2134 = vmatmul.mubr.bf16.gmra.mrb[0].mxu0 %v84
    %v2135 = vpop.f32.mrb[0].mxu0
    %v2136 = vadd.f32 0.0, %v2135
    %v2137 = vpop.f32.mrb[0].mxu0
    %v2138 = vadd.f32 0.0, %v2137
    %v2139 = vpop.f32.mrb[0].mxu0
    %v2140 = vadd.f32 0.0, %v2139
    %v2141 = vpop.f32.mrb[0].mxu0
    %v2142 = vadd.f32 0.0, %v2141
    %2143 = vmatprep.mubr.bf16.mxu0 %v87
    %2144 = vmatmul.mubr.bf16.gmra.mrb[0].mxu0 %v86
    %v2145 = vpop.f32.mrb[0].mxu0
    %v2146 = vadd.f32 0.0, %v2145
    %v2147 = vpop.f32.mrb[0].mxu0
    %v2148 = vadd.f32 0.0, %v2147
    %v2149 = vpop.f32.mrb[0].mxu0
    %v2150 = vadd.f32 0.0, %v2149
    %v2151 = vpop.f32.mrb[0].mxu0
    %v2152 = vadd.f32 0.0, %v2151
    %2153 = vdwg.mxu0
    %2154 = vmatprep.subr.bf16.mxu0 %v1585
    %2155 = vmatpush1.bf16.msra.mxu0 %v1584
    %2156 = vmatprep.subr.bf16.mxu0 %v1593
    %2157 = vmatpush1.bf16.msra.mxu0 %v1592
    %2158 = vmatprep.subr.bf16.mxu0 %v1601
    %2159 = vmatpush1.bf16.msra.mxu0 %v1600
    %2160 = vmatprep.subr.bf16.mxu0 %v1609
    %2161 = vmatpush1.bf16.msra.mxu0 %v1608
    %2162 = vmatprep.subr.bf16.mxu0 %v1617
    %2163 = vmatpush1.bf16.msra.mxu0 %v1616
    %2164 = vmatprep.subr.bf16.mxu0 %v1625
    %2165 = vmatpush1.bf16.msra.mxu0 %v1624
    %2166 = vmatprep.subr.bf16.mxu0 %v1633
    %2167 = vmatpush1.bf16.msra.mxu0 %v1632
    %2168 = vmatprep.subr.bf16.mxu0 %v1641
    %2169 = vmatpush1.bf16.msra.mxu0 %v1640
    %2170 = vmatprep.subr.bf16.mxu0 %v1649
    %2171 = vmatpush1.bf16.msra.mxu0 %v1648
    %2172 = vmatprep.subr.bf16.mxu0 %v1657
    %2173 = vmatpush1.bf16.msra.mxu0 %v1656
    %2174 = vmatprep.subr.bf16.mxu0 %v1665
    %2175 = vmatpush1.bf16.msra.mxu0 %v1664
    %2176 = vmatprep.subr.bf16.mxu0 %v1673
    %2177 = vmatpush1.bf16.msra.mxu0 %v1672
    %2178 = vmatprep.subr.bf16.mxu0 %v1681
    %2179 = vmatpush1.bf16.msra.mxu0 %v1680
    %2180 = vmatprep.subr.bf16.mxu0 %v1689
    %2181 = vmatpush1.bf16.msra.mxu0 %v1688
    %2182 = vmatprep.subr.bf16.mxu0 %v1697
    %2183 = vmatpush1.bf16.msra.mxu0 %v1696
    %2184 = vmatprep.subr.bf16.mxu0 %v1705
    %2185 = vmatpush1.bf16.msra.mxu0 %v1704
    %2186 = vmatprep.mubr.bf16.mxu0 %v85
    %2187 = vmatmul.mubr.bf16.gmra.mrb[0].mxu0 %v84
    %v2188 = vpop.f32.mrb[0].mxu0
    %v2189 = vadd.f32 0.0, %v2188
    %v2190 = vpop.f32.mrb[0].mxu0
    %v2191 = vadd.f32 0.0, %v2190
    %v2192 = vpop.f32.mrb[0].mxu0
    %v2193 = vadd.f32 0.0, %v2192
    %v2194 = vpop.f32.mrb[0].mxu0
    %v2195 = vadd.f32 0.0, %v2194
    %2196 = vmatprep.mubr.bf16.mxu0 %v87
    %2197 = vmatmul.mubr.bf16.gmra.mrb[0].mxu0 %v86
    %v2198 = vpop.f32.mrb[0].mxu0
    %v2199 = vadd.f32 0.0, %v2198
    %v2200 = vpop.f32.mrb[0].mxu0
    %v2201 = vadd.f32 0.0, %v2200
    %v2202 = vpop.f32.mrb[0].mxu0
    %v2203 = vadd.f32 0.0, %v2202
    %v2204 = vpop.f32.mrb[0].mxu0
    %v2205 = vadd.f32 0.0, %v2204
    %2206 = vdwg.mxu0
    %2207 = vmatprep.subr.bf16.mxu0 %v1587
    %2208 = vmatpush1.bf16.msra.mxu0 %v1586
    %2209 = vmatprep.subr.bf16.mxu0 %v1595
    %2210 = vmatpush1.bf16.msra.mxu0 %v1594
    %2211 = vmatprep.subr.bf16.mxu0 %v1603
    %2212 = vmatpush1.bf16.msra.mxu0 %v1602
    %2213 = vmatprep.subr.bf16.mxu0 %v1611
    %2214 = vmatpush1.bf16.msra.mxu0 %v1610
    %2215 = vmatprep.subr.bf16.mxu0 %v1619
    %2216 = vmatpush1.bf16.msra.mxu0 %v1618
    %2217 = vmatprep.subr.bf16.mxu0 %v1627
    %2218 = vmatpush1.bf16.msra.mxu0 %v1626
    %2219 = vmatprep.subr.bf16.mxu0 %v1635
    %2220 = vmatpush1.bf16.msra.mxu0 %v1634
    %2221 = vmatprep.subr.bf16.mxu0 %v1643
    %2222 = vmatpush1.bf16.msra.mxu0 %v1642
    %2223 = vmatprep.subr.bf16.mxu0 %v1651
    %2224 = vmatpush1.bf16.msra.mxu0 %v1650
    %2225 = vmatprep.subr.bf16.mxu0 %v1659
    %2226 = vmatpush1.bf16.msra.mxu0 %v1658
    %2227 = vmatprep.subr.bf16.mxu0 %v1667
    %2228 = vmatpush1.bf16.msra.mxu0 %v1666
    %2229 = vmatprep.subr.bf16.mxu0 %v1675
    %2230 = vmatpush1.bf16.msra.mxu0 %v1674
    %2231 = vmatprep.subr.bf16.mxu0 %v1683
    %2232 = vmatpush1.bf16.msra.mxu0 %v1682
    %2233 = vmatprep.subr.bf16.mxu0 %v1691
    %2234 = vmatpush1.bf16.msra.mxu0 %v1690
    %2235 = vmatprep.subr.bf16.mxu0 %v1699
    %2236 = vmatpush1.bf16.msra.mxu0 %v1698
    %2237 = vmatprep.subr.bf16.mxu0 %v1707
    %2238 = vmatpush1.bf16.msra.mxu0 %v1706
    %2239 = vmatprep.mubr.bf16.mxu0 %v85
    %2240 = vmatmul.mubr.bf16.gmra.mrb[0].mxu0 %v84
    %v2241 = vpop.f32.mrb[0].mxu0
    %v2242 = vadd.f32 0.0, %v2241
    %v2243 = vpop.f32.mrb[0].mxu0
    %v2244 = vadd.f32 0.0, %v2243
    %v2245 = vpop.f32.mrb[0].mxu0
    %v2246 = vadd.f32 0.0, %v2245
    %v2247 = vpop.f32.mrb[0].mxu0
    %v2248 = vadd.f32 0.0, %v2247
    %2249 = vmatprep.mubr.bf16.mxu0 %v87
    %2250 = vmatmul.mubr.bf16.gmra.mrb[0].mxu0 %v86
    %v2251 = vpop.f32.mrb[0].mxu0
    %v2252 = vadd.f32 0.0, %v2251
    %v2253 = vpop.f32.mrb[0].mxu0
    %v2254 = vadd.f32 0.0, %v2253
    %v2255 = vpop.f32.mrb[0].mxu0
    %v2256 = vadd.f32 0.0, %v2255
    %v2257 = vpop.f32.mrb[0].mxu0
    %v2258 = vadd.f32 0.0, %v2257
    %2259 = vdwg.mxu0
    %v2260 = vadd.f32 %v1871, %v2083
    %v2261 = vadd.f32 %v1873, %v2085
    %v2262 = vadd.f32 %v1924, %v2136
    %v2263 = vadd.f32 %v1926, %v2138
    %v2264 = vadd.f32 %v1977, %v2189
    %v2265 = vadd.f32 %v1979, %v2191
    %v2266 = vadd.f32 %v2030, %v2242
    %v2267 = vadd.f32 %v2032, %v2244
    %v2268 = vadd.f32 %v1875, %v2087
    %v2269 = vadd.f32 %v1877, %v2089
    %v2270 = vadd.f32 %v1928, %v2140
    %v2271 = vadd.f32 %v1930, %v2142
    %v2272 = vadd.f32 %v1981, %v2193
    %v2273 = vadd.f32 %v1983, %v2195
    %v2274 = vadd.f32 %v2034, %v2246
    %v2275 = vadd.f32 %v2036, %v2248
    %v2276 = vadd.f32 %v1881, %v2093
    %v2277 = vadd.f32 %v1883, %v2095
    %v2278 = vadd.f32 %v1934, %v2146
    %v2279 = vadd.f32 %v1936, %v2148
    %v2280 = vadd.f32 %v1987, %v2199
    %v2281 = vadd.f32 %v1989, %v2201
    %v2282 = vadd.f32 %v2040, %v2252
    %v2283 = vadd.f32 %v2042, %v2254
    %v2284 = vadd.f32 %v1885, %v2097
    %v2285 = vadd.f32 %v1887, %v2099
    %v2286 = vadd.f32 %v1938, %v2150
    %v2287 = vadd.f32 %v1940, %v2152
    %v2288 = vadd.f32 %v1991, %v2203
    %v2289 = vadd.f32 %v1993, %v2205
    %v2290 = vadd.f32 %v2044, %v2256
    %v2291 = vadd.f32 %v2046, %v2258
    %2292 = vst [vmem:[#allocation8] sm:$0xff] %v2260
    %2293 = vst [vmem:[#allocation8 + $0x8] sm:$0xff] %v2261
    %2294 = vst [vmem:[#allocation8 + $0x10] sm:$0xff] %v2262
    %2295 = vst [vmem:[#allocation8 + $0x18] sm:$0xff] %v2263
    %2296 = vst [vmem:[#allocation8 + $0x20] sm:$0xff] %v2264
    %2297 = vst [vmem:[#allocation8 + $0x28] sm:$0xff] %v2265
    %2298 = vst [vmem:[#allocation8 + $0x30] sm:$0xff] %v2266
    %2299 = vst [vmem:[#allocation8 + $0x38] sm:$0xff] %v2267
    %2300 = vst [vmem:[#allocation8 + $0x40] sm:$0xff] %v2268
    %2301 = vst [vmem:[#allocation8 + $0x48] sm:$0xff] %v2269
    %2302 = vst [vmem:[#allocation8 + $0x50] sm:$0xff] %v2270
    %2303 = vst [vmem:[#allocation8 + $0x58] sm:$0xff] %v2271
    %2304 = vst [vmem:[#allocation8 + $0x60] sm:$0xff] %v2272
    %2305 = vst [vmem:[#allocation8 + $0x68] sm:$0xff] %v2273
    %2306 = vst [vmem:[#allocation8 + $0x70] sm:$0xff] %v2274
    %2307 = vst [vmem:[#allocation8 + $0x78] sm:$0xff] %v2275
    %2308 = vst [vmem:[#allocation8 + $0x80] sm:$0xff] %v2276
    %2309 = vst [vmem:[#allocation8 + $0x88] sm:$0xff] %v2277
    %2310 = vst [vmem:[#allocation8 + $0x90] sm:$0xff] %v2278
    %2311 = vst [vmem:[#allocation8 + $0x98] sm:$0xff] %v2279
    %2312 = vst [vmem:[#allocation8 + $0xa0] sm:$0xff] %v2280
    %2313 = vst [vmem:[#allocation8 + $0xa8] sm:$0xff] %v2281
    %2314 = vst [vmem:[#allocation8 + $0xb0] sm:$0xff] %v2282
    %2315 = vst [vmem:[#allocation8 + $0xb8] sm:$0xff] %v2283
    %2316 = vst [vmem:[#allocation8 + $0xc0] sm:$0xff] %v2284
    %2317 = vst [vmem:[#allocation8 + $0xc8] sm:$0xff] %v2285
    %2318 = vst [vmem:[#allocation8 + $0xd0] sm:$0xff] %v2286
    %2319 = vst [vmem:[#allocation8 + $0xd8] sm:$0xff] %v2287
    %2320 = vst [vmem:[#allocation8 + $0xe0] sm:$0xff] %v2288
    %2321 = vst [vmem:[#allocation8 + $0xe8] sm:$0xff] %v2289
    %2322 = vst [vmem:[#allocation8 + $0xf0] sm:$0xff] %v2290
    %2323 = vst [vmem:[#allocation8 + $0xf8] sm:$0xff] %v2291
    // Predicated region
    $region26: #{tpu_custom_call.1} parent=1 // pred_check
      _
    $region27: #{tpu_custom_call.1} parent=1 // pred_check_branch
      %2325 = sbr.rel (0) target = $region29
    $region28: #{tpu_custom_call.1} parent=1 // pred_region
      %s2327 = ssub.s32 4096, 4096
      %2328 = vsyncadd [#allocation4], %s2327
      %s2329 = sshll.u32 [#allocation8], 4
      %s2330 = int_to_ptr.vmem [resolvable:$true] %s2329
      %2335 = dma.vmem_to_hbm [thread:$0]  %s2330, 4096, %s3, [#allocation4], 1024, 1024, 64
    $region29: #{tpu_custom_call.1} parent=1 // pred_fallthru
      _
    // Predicated region
    $region30: #{tpu_custom_call.1} parent=1 // pred_check
      _
    $region31: #{tpu_custom_call.1} parent=1 // pred_check_branch
      %2337 = sbr.rel (0) target = $region33
    $region32: #{tpu_custom_call.1} parent=1 // pred_region
      %2338 = dma.done [#allocation4], 4096
    $region33: #{tpu_custom_call.1} parent=1 // pred_fallthru
      _
    %2339 = vsyncpa [#allocation3], 1
    %2340 = vsyncpa [#allocation6], 1
    %2341 = vsyncpa [#allocation4], 1

</llo_original>
